<compile_context>
chip_gen: v7x
topology: tpu7x:2x2x1
jax: 0.10.0
libtpu: 0.0.40
codegen_flags: <defaults>
</compile_context>

<pallas_src>
from functools import partial

import jax
import jax.numpy as jnp
from jax.experimental import pallas as pl
from jax.experimental.pallas import tpu as pltpu


def down_conv_kernel(x_ref, w_ref, acc_ref, stats_ref, pp_ref, patch_ref):
    """MaxPool2d(2) + 3x3 conv (one bf16 MXU matmul) + per-image BN partials."""
    # x_ref:     (H, Wp, 2*Cin) f32   one image; W presented as (Wp, 2) merged with Cin
    # w_ref:     (9*Cin, Coutp) bf16  im2col weights, resident across grid steps
    # acc_ref:   (Hp*Wp, Coutp) f32   conv output (pre-BN) for this image
    # stats_ref: (2, Coutp)     f32   per-image [sum ; sum-of-squares] partials
    # pp_ref:    (Hp+2, Wp+2, Cin) bf16  scratch: pooled map with 1-wide zero ring
    # patch_ref: (Hp, Wp, 9*Cin)   bf16  scratch: im2col patches
    H, Wp, C2 = x_ref.shape
    Cin = C2 // 2
    Hp = H // 2

    # ---- MaxPool2d(2) -------------------------------------------------------
    # W-pair max = max of two contiguous lane slices (no stride-2 sublane loads);
    # H-pair max = free (Hp, 2, ...) reshape + max (stride only on the major dim).
    # Compares run in f32 (v5e has no bf16 VALU); bf16 cast happens at the store.
    xv = x_ref[...]
    wmax = jnp.maximum(xv[:, :, :Cin], xv[:, :, Cin:])          # (H, Wp, Cin)
    wmax = wmax.reshape(Hp, 2, Wp, Cin)
    pooled = jnp.maximum(wmax[:, 0], wmax[:, 1])                # (Hp, Wp, Cin)

    # Zero ring (the conv's pad=1) in VMEM -- no wrapper-side jnp.pad HBM pass.
    # Re-zeroed every step: scratch is uninitialized and, under "parallel"
    # megacore sharding, a given core may never execute grid step 0.
    pp_ref[0:1, :, :] = jnp.zeros((1, Wp + 2, Cin), pp_ref.dtype)
    pp_ref[Hp + 1:Hp + 2, :, :] = jnp.zeros((1, Wp + 2, Cin), pp_ref.dtype)
    pp_ref[:, 0:1, :] = jnp.zeros((Hp + 2, 1, Cin), pp_ref.dtype)
    pp_ref[:, Wp + 1:Wp + 2, :] = jnp.zeros((Hp + 2, 1, Cin), pp_ref.dtype)
    pp_ref[1:Hp + 1, 1:Wp + 1, :] = pooled.astype(pp_ref.dtype)

    # ---- Conv2d 3x3 (pad=1): im2col without concatenate ----------------------
    # 9 shifted-window stores into the patch scratch, then ONE MXU matmul with
    # dense K = 9*Cin, bf16 inputs and an f32 accumulator.
    for kh in range(3):
        for kw in range(3):
            c0 = (kh * 3 + kw) * Cin
            patch_ref[:, :, c0:c0 + Cin] = pp_ref[kh:kh + Hp, kw:kw + Wp, :]
    patches = patch_ref[...].reshape(Hp * Wp, 9 * Cin)
    acc = jnp.dot(patches, w_ref[...], preferred_element_type=jnp.float32)
    acc_ref[...] = acc                                          # (Hp*Wp, Coutp) f32

    # ---- per-image BN partials (combined + applied in pass 2) ----------------
    stats_ref[0:1, :] = jnp.sum(acc, axis=0, keepdims=True)
    stats_ref[1:2, :] = jnp.sum(acc * acc, axis=0, keepdims=True)


def bn_apply_kernel(stats_ref, g_ref, beta_ref, acc_ref, o_ref, *, inv_count, eps):
    """Training-mode BatchNorm2d: combine per-image partials, apply scale/shift."""
    # stats_ref: (N, 2, Coutp) f32  resident; [:, 0]=sum, [:, 1]=sum of squares
    # g_ref/beta_ref: (1, Coutp) f32
    # acc_ref/o_ref:  (Hp*Wp, Coutp) f32  (lane-dense: Coutp multiple of 128)
    tot = jnp.sum(stats_ref[...], axis=0)                       # (2, Coutp)
    mean = tot[0:1, :] * inv_count
    var = tot[1:2, :] * inv_count - mean * mean                 # biased var (torch training BN)
    scale = g_ref[...] * jax.lax.rsqrt(var + eps)               # gamma / sqrt(var + eps)
    shift = beta_ref[...] - mean * scale                        # conv bias cancels exactly
    o_ref[...] = acc_ref[...] * scale + shift


def down_forward(x_nchw, w_oihw, bias, gamma, beta, eps=1e-5):
    """Pallas implementation of Down.forward: (N, Cin, H, W) -> (N, Cout, H/2, W/2)."""
    N, Cin, H, W = x_nchw.shape
    Cout = w_oihw.shape[0]
    assert H % 2 == 0 and W % 2 == 0, (H, W)
    Hp, Wp = H // 2, W // 2
    Coutp = ((Cout + 127) // 128) * 128          # lane-dense output channels
    HWp = Hp * Wp
    P = N * HWp                                   # true BN element count per channel

    # Layout plumbing: NCHW -> NHWC is one XLA copy; the W -> (Wp, 2*Cin) merge
    # is a contiguous (free) reshape enabling contiguous-lane W-pair pooling.
    x_nhwc = jnp.transpose(x_nchw, (0, 2, 3, 1)).astype(jnp.float32)
    x_r = x_nhwc.reshape(N, H, Wp, 2 * Cin)

    # (Cout, Cin, 3, 3) -> (9*Cin, Coutp) bf16, row = (kh*3+kw)*Cin + ci.
    # Zero-padded channels produce exactly-zero outputs and are sliced off below.
    w_mat = jnp.transpose(w_oihw, (2, 3, 1, 0)).reshape(9 * Cin, Cout)
    w_mat = jnp.pad(w_mat, ((0, 0), (0, Coutp - Cout))).astype(jnp.bfloat16)
    g2 = jnp.pad(gamma, (0, Coutp - Cout)).reshape(1, Coutp).astype(jnp.float32)
    be2 = jnp.pad(beta, (0, Coutp - Cout)).reshape(1, Coutp).astype(jnp.float32)
    # conv bias: training-mode BN subtracts the batch mean, so the bias cancels
    # exactly and never needs to enter the kernels (kept in the signature only).
    del bias

    # ---- pass 1: pool + conv + per-image BN partials (grid over N, parallel) --
    conv_out, stats = pl.pallas_call(
        down_conv_kernel,
        grid=(N,),
        out_shape=(jax.ShapeDtypeStruct((N, HWp, Coutp), jnp.float32),
                   jax.ShapeDtypeStruct((N, 2, Coutp), jnp.float32)),
        in_specs=[pl.BlockSpec((None, H, Wp, 2 * Cin), lambda n: (n, 0, 0, 0)),
                  pl.BlockSpec((9 * Cin, Coutp), lambda n: (0, 0))],   # resident weights
        out_specs=(pl.BlockSpec((None, HWp, Coutp), lambda n: (n, 0, 0)),
                   pl.BlockSpec((None, 2, Coutp), lambda n: (n, 0, 0))),
        scratch_shapes=[pltpu.VMEM((Hp + 2, Wp + 2, Cin), jnp.bfloat16),
                        pltpu.VMEM((Hp, Wp, 9 * Cin), jnp.bfloat16)],
        compiler_params=pltpu.CompilerParams(
            dimension_semantics=("parallel",),
            vmem_limit_bytes=48 * 1024 * 1024),   # v7x: 64 MiB/TC -> stay under ~48 MiB
    )(x_r, w_mat)

    # ---- pass 2: combine partials, apply the BN FMA (lane-dense stores) -------
    normed = pl.pallas_call(
        partial(bn_apply_kernel, inv_count=1.0 / float(P), eps=float(eps)),
        grid=(N,),
        out_shape=jax.ShapeDtypeStruct((N, HWp, Coutp), jnp.float32),
        in_specs=[pl.BlockSpec((N, 2, Coutp), lambda n: (0, 0, 0)),    # resident
                  pl.BlockSpec((1, Coutp), lambda n: (0, 0)),          # gamma, resident
                  pl.BlockSpec((1, Coutp), lambda n: (0, 0)),          # beta, resident
                  pl.BlockSpec((None, HWp, Coutp), lambda n: (n, 0, 0))],
        out_specs=pl.BlockSpec((None, HWp, Coutp), lambda n: (n, 0, 0)),
        compiler_params=pltpu.CompilerParams(dimension_semantics=("parallel",)),
    )(stats, g2, be2, conv_out)

    # slice off the channel padding + back to NCHW (one fused XLA copy)
    out_nhwc = normed.reshape(N, Hp, Wp, Coutp)[..., :Cout]
    return jnp.transpose(out_nhwc, (0, 3, 1, 2))


def down_reference(x_nchw, w_oihw, bias, gamma, beta, eps=1e-5):
    """Pure-JAX reference (for correctness check)."""
    p = jax.lax.reduce_window(
        x_nchw, -jnp.inf, jax.lax.max,
        window_dimensions=(1, 1, 2, 2), window_strides=(1, 1, 2, 2), padding="VALID")
    y = jax.lax.conv_general_dilated(
        p, w_oihw, window_strides=(1, 1), padding=((1, 1), (1, 1)),
        dimension_numbers=("NCHW", "OIHW", "NCHW"),
        precision=jax.lax.Precision.HIGHEST)
    y = y + bias[None, :, None, None]
    mean = jnp.mean(y, axis=(0, 2, 3), keepdims=True)
    var = jnp.mean((y - mean) ** 2, axis=(0, 2, 3), keepdims=True)
    yhat = (y - mean) * jax.lax.rsqrt(var + eps)
    return yhat * gamma[None, :, None, None] + beta[None, :, None, None]


if __name__ == "__main__":
    N, Cin, Cout, H, W = 2, 4, 8, 16, 16

    key = jax.random.PRNGKey(0)
    kx, kw, kb = jax.random.split(key, 3)

    # deterministic parameter init (shapes match nn.Conv2d(Cin, Cout, 3) + nn.BatchNorm2d(Cout))
    fan_in = Cin * 3 * 3
    bound = 1.0 / (fan_in ** 0.5)
    conv_w = jax.random.uniform(kw, (Cout, Cin, 3, 3), jnp.float32, -bound, bound)
    conv_b = jax.random.uniform(kb, (Cout,), jnp.float32, -bound, bound)
    bn_gamma = jnp.ones((Cout,), jnp.float32)
    bn_beta = jnp.zeros((Cout,), jnp.float32)

    x = jax.random.normal(kx, (N, Cin, H, W), jnp.float32)

    out = jax.jit(down_forward)(x, conv_w, conv_b, bn_gamma, bn_beta)
    out = jax.block_until_ready(out)

    ref = down_reference(x, conv_w, conv_b, bn_gamma, bn_beta)
    assert out.shape == (N, Cout, H // 2, W // 2), out.shape
    err = float(jnp.max(jnp.abs(out - ref)))
    # bf16 MXU inputs with an f32 accumulator: tolerance reflects bf16 rounding.
    assert jnp.allclose(out, ref, atol=2e-2, rtol=2e-2), err

    print("KERNEL_OK")
</pallas_src>

<mosaic_0001>
module attributes {stable_mosaic.version = 11 : i64} {
  func.func @down_conv_kernel(%arg0: i32, %arg1: memref<1x16x8x8xf32, #tpu.memory_space<vmem>>, %arg2: memref<36x128xbf16, #tpu.memory_space<vmem>>, %arg3: memref<1x64x128xf32, #tpu.memory_space<vmem>>, %arg4: memref<1x2x128xf32, #tpu.memory_space<vmem>>, %arg5: memref<10x10x4xbf16, #tpu.memory_space<vmem>>, %arg6: memref<8x8x36xbf16, #tpu.memory_space<vmem>>) attributes {dimension_semantics = [#tpu.dimension_semantics<parallel>], iteration_bounds = array<i64: 2>, scalar_prefetch = 0 : i64, scratch_operands = 2 : i64, tpu.core_type = #tpu.core_type<tc>, window_params = [{transform_indices = @transform_0, window_bounds = array<i64: 1, 16, 8, 8>}, {pipeline_mode = #tpu.pipeline_mode<synchronous>, transform_indices = @transform_1, window_bounds = array<i64: 36, 128>}, {transform_indices = @transform_2, window_bounds = array<i64: 1, 64, 128>}, {transform_indices = @transform_3, window_bounds = array<i64: 1, 2, 128>}]} {
    %c0 = arith.constant 0 : index
    %c0_0 = arith.constant 0 : index
    %c0_1 = arith.constant 0 : index
    %c0_2 = arith.constant 0 : index
    %0 = vector.load %arg1[%c0, %c0_0, %c0_1, %c0_2] : memref<1x16x8x8xf32, #tpu.memory_space<vmem>>, vector<1x16x8x8xf32>
    %1 = vector.shape_cast %0 : vector<1x16x8x8xf32> to vector<16x8x8xf32>
    %2 = vector.extract_strided_slice %1 {offsets = [0, 0, 0], sizes = [16, 8, 4], strides = [1, 1, 1]} : vector<16x8x8xf32> to vector<16x8x4xf32>
    %3 = vector.extract_strided_slice %1 {offsets = [0, 0, 4], sizes = [16, 8, 4], strides = [1, 1, 1]} : vector<16x8x8xf32> to vector<16x8x4xf32>
    %4 = arith.maximumf %2, %3 : vector<16x8x4xf32>
    %5 = vector.shape_cast %4 : vector<16x8x4xf32> to vector<8x2x8x4xf32>
    %6 = vector.extract_strided_slice %5 {offsets = [0, 0, 0, 0], sizes = [8, 1, 8, 4], strides = [1, 1, 1, 1]} : vector<8x2x8x4xf32> to vector<8x1x8x4xf32>
    %7 = vector.shape_cast %6 : vector<8x1x8x4xf32> to vector<8x8x4xf32>
    %8 = vector.extract_strided_slice %5 {offsets = [0, 1, 0, 0], sizes = [8, 1, 8, 4], strides = [1, 1, 1, 1]} : vector<8x2x8x4xf32> to vector<8x1x8x4xf32>
    %9 = vector.shape_cast %8 : vector<8x1x8x4xf32> to vector<8x8x4xf32>
    %10 = arith.maximumf %7, %9 : vector<8x8x4xf32>
    %cst = arith.constant 0.000000e+00 : bf16
    %11 = vector.broadcast %cst : bf16 to vector<1x10x4xbf16>
    %c0_3 = arith.constant 0 : index
    %c0_4 = arith.constant 0 : index
    %c0_5 = arith.constant 0 : index
    %12 = vector.load %arg5[%c0_3, %c0_4, %c0_5] : memref<10x10x4xbf16, #tpu.memory_space<vmem>>, vector<1x10x4xbf16>
    tpu.vector_store %arg5[%c0_3, %c0_4, %c0_5], %11 {strides = array<i32>} : memref<10x10x4xbf16, #tpu.memory_space<vmem>>, vector<1x10x4xbf16>,
    %cst_6 = arith.constant 0.000000e+00 : bf16
    %13 = vector.broadcast %cst_6 : bf16 to vector<1x10x4xbf16>
    %c9 = arith.constant 9 : index
    %c0_7 = arith.constant 0 : index
    %c0_8 = arith.constant 0 : index
    %14 = vector.load %arg5[%c9, %c0_7, %c0_8] : memref<10x10x4xbf16, #tpu.memory_space<vmem>>, vector<1x10x4xbf16>
    tpu.vector_store %arg5[%c9, %c0_7, %c0_8], %13 {strides = array<i32>} : memref<10x10x4xbf16, #tpu.memory_space<vmem>>, vector<1x10x4xbf16>,
    %cst_9 = arith.constant 0.000000e+00 : bf16
    %15 = vector.broadcast %cst_9 : bf16 to vector<10x1x4xbf16>
    %c0_10 = arith.constant 0 : index
    %c0_11 = arith.constant 0 : index
    %c0_12 = arith.constant 0 : index
    %16 = vector.load %arg5[%c0_10, %c0_11, %c0_12] : memref<10x10x4xbf16, #tpu.memory_space<vmem>>, vector<10x1x4xbf16>
    tpu.vector_store %arg5[%c0_10, %c0_11, %c0_12], %15 {strides = array<i32>} : memref<10x10x4xbf16, #tpu.memory_space<vmem>>, vector<10x1x4xbf16>,
    %cst_13 = arith.constant 0.000000e+00 : bf16
    %17 = vector.broadcast %cst_13 : bf16 to vector<10x1x4xbf16>
    %c0_14 = arith.constant 0 : index
    %c9_15 = arith.constant 9 : index
    %c0_16 = arith.constant 0 : index
    %18 = vector.load %arg5[%c0_14, %c9_15, %c0_16] : memref<10x10x4xbf16, #tpu.memory_space<vmem>>, vector<10x1x4xbf16>
    tpu.vector_store %arg5[%c0_14, %c9_15, %c0_16], %17 {strides = array<i32>} : memref<10x10x4xbf16, #tpu.memory_space<vmem>>, vector<10x1x4xbf16>,
    %19 = arith.truncf %10 : vector<8x8x4xf32> to vector<8x8x4xbf16>
    %c1 = arith.constant 1 : index
    %c1_17 = arith.constant 1 : index
    %c0_18 = arith.constant 0 : index
    %20 = vector.load %arg5[%c1, %c1_17, %c0_18] : memref<10x10x4xbf16, #tpu.memory_space<vmem>>, vector<8x8x4xbf16>
    tpu.vector_store %arg5[%c1, %c1_17, %c0_18], %19 {strides = array<i32>} : memref<10x10x4xbf16, #tpu.memory_space<vmem>>, vector<8x8x4xbf16>,
    %c0_19 = arith.constant 0 : index
    %c0_20 = arith.constant 0 : index
    %c0_21 = arith.constant 0 : index
    %21 = vector.load %arg5[%c0_19, %c0_20, %c0_21] : memref<10x10x4xbf16, #tpu.memory_space<vmem>>, vector<8x8x4xbf16>
    %c0_22 = arith.constant 0 : index
    %c0_23 = arith.constant 0 : index
    %c0_24 = arith.constant 0 : index
    %22 = vector.load %arg6[%c0_22, %c0_23, %c0_24] : memref<8x8x36xbf16, #tpu.memory_space<vmem>>, vector<8x8x4xbf16>
    tpu.vector_store %arg6[%c0_22, %c0_23, %c0_24], %21 {strides = array<i32>} : memref<8x8x36xbf16, #tpu.memory_space<vmem>>, vector<8x8x4xbf16>,
    %c0_25 = arith.constant 0 : index
    %c1_26 = arith.constant 1 : index
    %c0_27 = arith.constant 0 : index
    %23 = vector.load %arg5[%c0_25, %c1_26, %c0_27] : memref<10x10x4xbf16, #tpu.memory_space<vmem>>, vector<8x8x4xbf16>
    %c0_28 = arith.constant 0 : index
    %c0_29 = arith.constant 0 : index
    %c4 = arith.constant 4 : index
    %24 = vector.load %arg6[%c0_28, %c0_29, %c4] : memref<8x8x36xbf16, #tpu.memory_space<vmem>>, vector<8x8x4xbf16>
    tpu.vector_store %arg6[%c0_28, %c0_29, %c4], %23 {strides = array<i32>} : memref<8x8x36xbf16, #tpu.memory_space<vmem>>, vector<8x8x4xbf16>,
    %c0_30 = arith.constant 0 : index
    %c2 = arith.constant 2 : index
    %c0_31 = arith.constant 0 : index
    %25 = vector.load %arg5[%c0_30, %c2, %c0_31] : memref<10x10x4xbf16, #tpu.memory_space<vmem>>, vector<8x8x4xbf16>
    %c0_32 = arith.constant 0 : index
    %c0_33 = arith.constant 0 : index
    %c8 = arith.constant 8 : index
    %26 = vector.load %arg6[%c0_32, %c0_33, %c8] : memref<8x8x36xbf16, #tpu.memory_space<vmem>>, vector<8x8x4xbf16>
    tpu.vector_store %arg6[%c0_32, %c0_33, %c8], %25 {strides = array<i32>} : memref<8x8x36xbf16, #tpu.memory_space<vmem>>, vector<8x8x4xbf16>,
    %c1_34 = arith.constant 1 : index
    %c0_35 = arith.constant 0 : index
    %c0_36 = arith.constant 0 : index
    %27 = vector.load %arg5[%c1_34, %c0_35, %c0_36] : memref<10x10x4xbf16, #tpu.memory_space<vmem>>, vector<8x8x4xbf16>
    %c0_37 = arith.constant 0 : index
    %c0_38 = arith.constant 0 : index
    %c12 = arith.constant 12 : index
    %28 = vector.load %arg6[%c0_37, %c0_38, %c12] : memref<8x8x36xbf16, #tpu.memory_space<vmem>>, vector<8x8x4xbf16>
    tpu.vector_store %arg6[%c0_37, %c0_38, %c12], %27 {strides = array<i32>} : memref<8x8x36xbf16, #tpu.memory_space<vmem>>, vector<8x8x4xbf16>,
    %c1_39 = arith.constant 1 : index
    %c1_40 = arith.constant 1 : index
    %c0_41 = arith.constant 0 : index
    %29 = vector.load %arg5[%c1_39, %c1_40, %c0_41] : memref<10x10x4xbf16, #tpu.memory_space<vmem>>, vector<8x8x4xbf16>
    %c0_42 = arith.constant 0 : index
    %c0_43 = arith.constant 0 : index
    %c16 = arith.constant 16 : index
    %30 = vector.load %arg6[%c0_42, %c0_43, %c16] : memref<8x8x36xbf16, #tpu.memory_space<vmem>>, vector<8x8x4xbf16>
    tpu.vector_store %arg6[%c0_42, %c0_43, %c16], %29 {strides = array<i32>} : memref<8x8x36xbf16, #tpu.memory_space<vmem>>, vector<8x8x4xbf16>,
    %c1_44 = arith.constant 1 : index
    %c2_45 = arith.constant 2 : index
    %c0_46 = arith.constant 0 : index
    %31 = vector.load %arg5[%c1_44, %c2_45, %c0_46] : memref<10x10x4xbf16, #tpu.memory_space<vmem>>, vector<8x8x4xbf16>
    %c0_47 = arith.constant 0 : index
    %c0_48 = arith.constant 0 : index
    %c20 = arith.constant 20 : index
    %32 = vector.load %arg6[%c0_47, %c0_48, %c20] : memref<8x8x36xbf16, #tpu.memory_space<vmem>>, vector<8x8x4xbf16>
    tpu.vector_store %arg6[%c0_47, %c0_48, %c20], %31 {strides = array<i32>} : memref<8x8x36xbf16, #tpu.memory_space<vmem>>, vector<8x8x4xbf16>,
    %c2_49 = arith.constant 2 : index
    %c0_50 = arith.constant 0 : index
    %c0_51 = arith.constant 0 : index
    %33 = vector.load %arg5[%c2_49, %c0_50, %c0_51] : memref<10x10x4xbf16, #tpu.memory_space<vmem>>, vector<8x8x4xbf16>
    %c0_52 = arith.constant 0 : index
    %c0_53 = arith.constant 0 : index
    %c24 = arith.constant 24 : index
    %34 = vector.load %arg6[%c0_52, %c0_53, %c24] : memref<8x8x36xbf16, #tpu.memory_space<vmem>>, vector<8x8x4xbf16>
    tpu.vector_store %arg6[%c0_52, %c0_53, %c24], %33 {strides = array<i32>} : memref<8x8x36xbf16, #tpu.memory_space<vmem>>, vector<8x8x4xbf16>,
    %c2_54 = arith.constant 2 : index
    %c1_55 = arith.constant 1 : index
    %c0_56 = arith.constant 0 : index
    %35 = vector.load %arg5[%c2_54, %c1_55, %c0_56] : memref<10x10x4xbf16, #tpu.memory_space<vmem>>, vector<8x8x4xbf16>
    %c0_57 = arith.constant 0 : index
    %c0_58 = arith.constant 0 : index
    %c28 = arith.constant 28 : index
    %36 = vector.load %arg6[%c0_57, %c0_58, %c28] : memref<8x8x36xbf16, #tpu.memory_space<vmem>>, vector<8x8x4xbf16>
    tpu.vector_store %arg6[%c0_57, %c0_58, %c28], %35 {strides = array<i32>} : memref<8x8x36xbf16, #tpu.memory_space<vmem>>, vector<8x8x4xbf16>,
    %c2_59 = arith.constant 2 : index
    %c2_60 = arith.constant 2 : index
    %c0_61 = arith.constant 0 : index
    %37 = vector.load %arg5[%c2_59, %c2_60, %c0_61] : memref<10x10x4xbf16, #tpu.memory_space<vmem>>, vector<8x8x4xbf16>
    %c0_62 = arith.constant 0 : index
    %c0_63 = arith.constant 0 : index
    %c32 = arith.constant 32 : index
    %38 = vector.load %arg6[%c0_62, %c0_63, %c32] : memref<8x8x36xbf16, #tpu.memory_space<vmem>>, vector<8x8x4xbf16>
    tpu.vector_store %arg6[%c0_62, %c0_63, %c32], %37 {strides = array<i32>} : memref<8x8x36xbf16, #tpu.memory_space<vmem>>, vector<8x8x4xbf16>,
    %c0_64 = arith.constant 0 : index
    %c0_65 = arith.constant 0 : index
    %c0_66 = arith.constant 0 : index
    %39 = vector.load %arg6[%c0_64, %c0_65, %c0_66] : memref<8x8x36xbf16, #tpu.memory_space<vmem>>, vector<8x8x36xbf16>
    %40 = vector.shape_cast %39 : vector<8x8x36xbf16> to vector<64x36xbf16>
    %c0_67 = arith.constant 0 : index
    %c0_68 = arith.constant 0 : index
    %41 = vector.load %arg2[%c0_67, %c0_68] : memref<36x128xbf16, #tpu.memory_space<vmem>>, vector<36x128xbf16>
    %cst_69 = arith.constant dense<0.000000e+00> : vector<64x128xf32>
    %42 = tpu.matmul %40, %41, %cst_69 {dimension_numbers = #tpu.dot_dimension_numbers<[1], [0], [0], [1], [0, 0, 1, 1], [], []>} : vector<64x36xbf16>, vector<36x128xbf16>, vector<64x128xf32> -> vector<64x128xf32>
    %c0_70 = arith.constant 0 : index
    %c0_71 = arith.constant 0 : index
    %c0_72 = arith.constant 0 : index
    %43 = vector.load %arg3[%c0_70, %c0_71, %c0_72] : memref<1x64x128xf32, #tpu.memory_space<vmem>>, vector<1x64x128xf32>
    %44 = vector.shape_cast %43 : vector<1x64x128xf32> to vector<64x128xf32>
    %45 = vector.shape_cast %42 : vector<64x128xf32> to vector<1x64x128xf32>
    tpu.vector_store %arg3[%c0_70, %c0_71, %c0_72], %45 {strides = array<i32>} : memref<1x64x128xf32, #tpu.memory_space<vmem>>, vector<1x64x128xf32>,
    %cst_73 = arith.constant dense<0.000000e+00> : vector<128xf32>
    %46 = vector.multi_reduction <add>, %42, %cst_73 [0] : vector<64x128xf32> to vector<128xf32>
    %47 = vector.shape_cast %46 : vector<128xf32> to vector<1x128xf32>
    %c0_74 = arith.constant 0 : index
    %c0_75 = arith.constant 0 : index
    %c0_76 = arith.constant 0 : index
    %48 = vector.load %arg4[%c0_74, %c0_75, %c0_76] : memref<1x2x128xf32, #tpu.memory_space<vmem>>, vector<1x1x128xf32>
    %49 = vector.shape_cast %48 : vector<1x1x128xf32> to vector<1x128xf32>
    %50 = vector.shape_cast %47 : vector<1x128xf32> to vector<1x1x128xf32>
    tpu.vector_store %arg4[%c0_74, %c0_75, %c0_76], %50 {strides = array<i32>} : memref<1x2x128xf32, #tpu.memory_space<vmem>>, vector<1x1x128xf32>,
    %51 = arith.mulf %42, %42 : vector<64x128xf32>
    %cst_77 = arith.constant dense<0.000000e+00> : vector<128xf32>
    %52 = vector.multi_reduction <add>, %51, %cst_77 [0] : vector<64x128xf32> to vector<128xf32>
    %53 = vector.shape_cast %52 : vector<128xf32> to vector<1x128xf32>
    %c0_78 = arith.constant 0 : index
    %c1_79 = arith.constant 1 : index
    %c0_80 = arith.constant 0 : index
    %54 = vector.load %arg4[%c0_78, %c1_79, %c0_80] : memref<1x2x128xf32, #tpu.memory_space<vmem>>, vector<1x1x128xf32>
    %55 = vector.shape_cast %54 : vector<1x1x128xf32> to vector<1x128xf32>
    %56 = vector.shape_cast %53 : vector<1x128xf32> to vector<1x1x128xf32>
    tpu.vector_store %arg4[%c0_78, %c1_79, %c0_80], %56 {strides = array<i32>} : memref<1x2x128xf32, #tpu.memory_space<vmem>>, vector<1x1x128xf32>,
    return
  }
  func.func @transform_0(%arg0: i32) -> (i32, i32, i32, i32) {
    %c0_i32 = arith.constant 0 : i32
    %c0_i32_0 = arith.constant 0 : i32
    %c0_i32_1 = arith.constant 0 : i32
    %c0_i32_2 = arith.constant 0 : i32
    return %arg0, %c0_i32, %c0_i32_0, %c0_i32_1 : i32, i32, i32, i32
  }
  func.func @transform_1(%arg0: i32) -> (i32, i32) {
    %c0_i32 = arith.constant 0 : i32
    %c0_i32_0 = arith.constant 0 : i32
    %c0_i32_1 = arith.constant 0 : i32
    return %c0_i32, %c0_i32_0 : i32, i32
  }
  func.func @transform_2(%arg0: i32) -> (i32, i32, i32) {
    %c0_i32 = arith.constant 0 : i32
    %c0_i32_0 = arith.constant 0 : i32
    %c0_i32_1 = arith.constant 0 : i32
    return %arg0, %c0_i32, %c0_i32_0 : i32, i32, i32
  }
  func.func @transform_3(%arg0: i32) -> (i32, i32, i32) {
    %c0_i32 = arith.constant 0 : i32
    %c0_i32_0 = arith.constant 0 : i32
    %c0_i32_1 = arith.constant 0 : i32
    return %arg0, %c0_i32, %c0_i32_0 : i32, i32, i32
  }
}

module attributes {stable_mosaic.version = 11 : i64} {
  func.func @bn_apply_kernel(%arg0: i32, %arg1: memref<2x2x128xf32, #tpu.memory_space<vmem>>, %arg2: memref<1x128xf32, #tpu.memory_space<vmem>>, %arg3: memref<1x128xf32, #tpu.memory_space<vmem>>, %arg4: memref<1x64x128xf32, #tpu.memory_space<vmem>>, %arg5: memref<1x64x128xf32, #tpu.memory_space<vmem>>) attributes {dimension_semantics = [#tpu.dimension_semantics<parallel>], iteration_bounds = array<i64: 2>, scalar_prefetch = 0 : i64, scratch_operands = 0 : i64, tpu.core_type = #tpu.core_type<tc>, window_params = [{pipeline_mode = #tpu.pipeline_mode<synchronous>, transform_indices = @transform_0, window_bounds = array<i64: 2, 2, 128>}, {pipeline_mode = #tpu.pipeline_mode<synchronous>, transform_indices = @transform_1, window_bounds = array<i64: 1, 128>}, {pipeline_mode = #tpu.pipeline_mode<synchronous>, transform_indices = @transform_2, window_bounds = array<i64: 1, 128>}, {transform_indices = @transform_3, window_bounds = array<i64: 1, 64, 128>}, {transform_indices = @transform_4, window_bounds = array<i64: 1, 64, 128>}]} {
    %c0 = arith.constant 0 : index
    %c0_0 = arith.constant 0 : index
    %c0_1 = arith.constant 0 : index
    %0 = vector.load %arg1[%c0, %c0_0, %c0_1] : memref<2x2x128xf32, #tpu.memory_space<vmem>>, vector<2x2x128xf32>
    %cst = arith.constant dense<0.000000e+00> : vector<2x128xf32>
    %1 = vector.multi_reduction <add>, %0, %cst [0] : vector<2x2x128xf32> to vector<2x128xf32>
    %2 = vector.extract_strided_slice %1 {offsets = [0, 0], sizes = [1, 128], strides = [1, 1]} : vector<2x128xf32> to vector<1x128xf32>
    %cst_2 = arith.constant 7.812500e-03 : f32
    %3 = vector.broadcast %cst_2 : f32 to vector<1x128xf32>
    %4 = arith.mulf %2, %3 : vector<1x128xf32>
    %5 = vector.extract_strided_slice %1 {offsets = [1, 0], sizes = [1, 128], strides = [1, 1]} : vector<2x128xf32> to vector<1x128xf32>
    %cst_3 = arith.constant 7.812500e-03 : f32
    %6 = vector.broadcast %cst_3 : f32 to vector<1x128xf32>
    %7 = arith.mulf %5, %6 : vector<1x128xf32>
    %8 = arith.mulf %4, %4 : vector<1x128xf32>
    %9 = arith.subf %7, %8 : vector<1x128xf32>
    %c0_4 = arith.constant 0 : index
    %c0_5 = arith.constant 0 : index
    %10 = vector.load %arg2[%c0_4, %c0_5] : memref<1x128xf32, #tpu.memory_space<vmem>>, vector<1x128xf32>
    %cst_6 = arith.constant 9.99999974E-6 : f32
    %11 = vector.broadcast %cst_6 : f32 to vector<1x128xf32>
    %12 = arith.addf %9, %11 : vector<1x128xf32>
    %13 = math.rsqrt %12 : vector<1x128xf32>
    %14 = arith.mulf %10, %13 : vector<1x128xf32>
    %c0_7 = arith.constant 0 : index
    %c0_8 = arith.constant 0 : index
    %15 = vector.load %arg3[%c0_7, %c0_8] : memref<1x128xf32, #tpu.memory_space<vmem>>, vector<1x128xf32>
    %16 = arith.mulf %4, %14 : vector<1x128xf32>
    %17 = arith.subf %15, %16 : vector<1x128xf32>
    %c0_9 = arith.constant 0 : index
    %c0_10 = arith.constant 0 : index
    %c0_11 = arith.constant 0 : index
    %18 = vector.load %arg4[%c0_9, %c0_10, %c0_11] : memref<1x64x128xf32, #tpu.memory_space<vmem>>, vector<1x64x128xf32>
    %19 = vector.shape_cast %18 : vector<1x64x128xf32> to vector<64x128xf32>
    %20 = vector.broadcast %14 : vector<1x128xf32> to vector<64x128xf32>
    %21 = arith.mulf %19, %20 : vector<64x128xf32>
    %22 = vector.broadcast %17 : vector<1x128xf32> to vector<64x128xf32>
    %23 = arith.addf %21, %22 : vector<64x128xf32>
    %c0_12 = arith.constant 0 : index
    %c0_13 = arith.constant 0 : index
    %c0_14 = arith.constant 0 : index
    %24 = vector.load %arg5[%c0_12, %c0_13, %c0_14] : memref<1x64x128xf32, #tpu.memory_space<vmem>>, vector<1x64x128xf32>
    %25 = vector.shape_cast %24 : vector<1x64x128xf32> to vector<64x128xf32>
    %26 = vector.shape_cast %23 : vector<64x128xf32> to vector<1x64x128xf32>
    tpu.vector_store %arg5[%c0_12, %c0_13, %c0_14], %26 {strides = array<i32>} : memref<1x64x128xf32, #tpu.memory_space<vmem>>, vector<1x64x128xf32>,
    return
  }
  func.func @transform_0(%arg0: i32) -> (i32, i32, i32) {
    %c0_i32 = arith.constant 0 : i32
    %c0_i32_0 = arith.constant 0 : i32
    %c0_i32_1 = arith.constant 0 : i32
    %c0_i32_2 = arith.constant 0 : i32
    return %c0_i32, %c0_i32_0, %c0_i32_1 : i32, i32, i32
  }
  func.func @transform_1(%arg0: i32) -> (i32, i32) {
    %c0_i32 = arith.constant 0 : i32
    %c0_i32_0 = arith.constant 0 : i32
    %c0_i32_1 = arith.constant 0 : i32
    return %c0_i32, %c0_i32_0 : i32, i32
  }
  func.func @transform_2(%arg0: i32) -> (i32, i32) {
    %c0_i32 = arith.constant 0 : i32
    %c0_i32_0 = arith.constant 0 : i32
    %c0_i32_1 = arith.constant 0 : i32
    return %c0_i32, %c0_i32_0 : i32, i32
  }
  func.func @transform_3(%arg0: i32) -> (i32, i32, i32) {
    %c0_i32 = arith.constant 0 : i32
    %c0_i32_0 = arith.constant 0 : i32
    %c0_i32_1 = arith.constant 0 : i32
    return %arg0, %c0_i32, %c0_i32_0 : i32, i32, i32
  }
  func.func @transform_4(%arg0: i32) -> (i32, i32, i32) {
    %c0_i32 = arith.constant 0 : i32
    %c0_i32_0 = arith.constant 0 : i32
    %c0_i32_1 = arith.constant 0 : i32
    return %arg0, %c0_i32, %c0_i32_0 : i32, i32, i32
  }
}

</mosaic_0001>

<llo_original>
// kernel: down_forward.3
$region0: #{down_forward.3}
  #allocation0 [shape = 'u32[]', space=smem, size = 0x4, offset = 0x4, fixed_abs, tag = 'smem constant byte address 0x4 - core index']
  #allocation1 [shape = 'u32[144,128]{1,0:T(1,128)}', space=vmem, size = 0x12000, scoped, tag = 'internal scratch']
  %s0 = inlined_call_operand.vmem [shape: f32[2,2,128], index: 0, kind: input, shape index: {}]
  %s1 = inlined_call_operand.vmem [shape: f32[1,128], index: 1, kind: input, shape index: {}]
  %s2 = inlined_call_operand.vmem [shape: f32[1,128], index: 2, kind: input, shape index: {}]
  %s3 = inlined_call_operand.vmem [shape: f32[2,64,128], index: 3, kind: input, shape index: {}]
  %s4 = inlined_call_operand.vmem [shape: f32[2,64,128], index: 4, kind: output, shape index: {}]
  %s5 = sld [smem:[#allocation0]]
  $region49: #{down_forward.3} parent=0
    _
  %s7 = ssub.s32 1, %s5
  %s8 = scalar_select 0, %s7, %s5
  loop: start=0, step=1, limit=4
  $region2: #{down_forward.3} parent=0 // loop_pre_header
    _
  $region3: #{down_forward.3} parent=0 // loop_header
    %s10 = sphi 0, %s14
    %p11 = scmp.ge.s32.totalorder %s10, 4
    %s18 = sphi 0, %s18
    %s20 = sphi 0, %s18
    %s21 = sphi 0, %s20
    %s35 = sphi 0, %s21
    %s39 = sphi 0, %s39
    %s41 = sphi 0, %s39
    %s42 = sphi 0, %s41
    %s56 = sphi 0, %s42
    %s60 = sphi 0, %s60
    %s62 = sphi 0, %s60
    %s63 = sphi 0, %s62
    %s77 = sphi 0, %s63
    %s83 = sphi 0, %s85
    %s86 = sphi 0, %s83
    %s87 = sphi 0, %s86
    %s103 = sphi 0, %s87
    %s109 = sphi 0, %s111
    %s112 = sphi 0, %s109
    %s113 = sphi 0, %s112
    %s129 = sphi 0, %s113
  $region4: #{down_forward.3} parent=0 // loop_header_branch
    %13 = sbr.rel (%p11) target = $region8
  $region5: #{down_forward.3} parent=0 // loop_body
    %s15 = ssub.s32 %s10, 1
    %s16 = ssub.s32 %s10, 2
    %s17 = sadd.s32 %s10, 1
    %s19 = sadd.s32 %s18, 1
    %p22 = scmp.eq.s32.totalorder %s10, 1
    %p23 = scmp.ne.s32.totalorder %s18, %s20
    %p24 = scmp.eq.s32.totalorder %s10, 0
    %p25 = por %p23, %p24
    %p26 = scmp.ne.s32.totalorder %s18, %s20
    %p27 = scmp.eq.s32.totalorder %s15, 1
    %p28 = por %p26, %p27
    %p29 = scmp.ne.s32.totalorder %s20, %s21
    %p30 = scmp.eq.s32.totalorder %s15, 0
    %p31 = por %p29, %p30
    %p32 = scmp.ne.s32.totalorder %s20, %s21
    %p33 = scmp.eq.s32.totalorder %s16, 1
    %p34 = por %p32, %p33
    %p36 = scmp.ne.s32.totalorder %s21, %s35
    %p37 = scmp.eq.s32.totalorder %s16, 0
    %p38 = por %p36, %p37
    %s40 = sadd.s32 %s39, 1
    %p43 = scmp.eq.s32.totalorder %s10, 1
    %p44 = scmp.ne.s32.totalorder %s39, %s41
    %p45 = scmp.eq.s32.totalorder %s10, 0
    %p46 = por %p44, %p45
    %p47 = scmp.ne.s32.totalorder %s39, %s41
    %p48 = scmp.eq.s32.totalorder %s15, 1
    %p49 = por %p47, %p48
    %p50 = scmp.ne.s32.totalorder %s41, %s42
    %p51 = scmp.eq.s32.totalorder %s15, 0
    %p52 = por %p50, %p51
    %p53 = scmp.ne.s32.totalorder %s41, %s42
    %p54 = scmp.eq.s32.totalorder %s16, 1
    %p55 = por %p53, %p54
    %p57 = scmp.ne.s32.totalorder %s42, %s56
    %p58 = scmp.eq.s32.totalorder %s16, 0
    %p59 = por %p57, %p58
    %s61 = sadd.s32 %s60, 1
    %p64 = scmp.eq.s32.totalorder %s10, 1
    %p65 = scmp.ne.s32.totalorder %s60, %s62
    %p66 = scmp.eq.s32.totalorder %s10, 0
    %p67 = por %p65, %p66
    %p68 = scmp.ne.s32.totalorder %s60, %s62
    %p69 = scmp.eq.s32.totalorder %s15, 1
    %p70 = por %p68, %p69
    %p71 = scmp.ne.s32.totalorder %s62, %s63
    %p72 = scmp.eq.s32.totalorder %s15, 0
    %p73 = por %p71, %p72
    %p74 = scmp.ne.s32.totalorder %s62, %s63
    %p75 = scmp.eq.s32.totalorder %s16, 1
    %p76 = por %p74, %p75
    %p78 = scmp.ne.s32.totalorder %s63, %s77
    %p79 = scmp.eq.s32.totalorder %s16, 0
    %p80 = por %p78, %p79
    %s81 = ssub.s32 %s10, %s17
    %p82 = scmp.eq.s32.totalorder %s81, 0
    %s84 = sadd.s32 %s83, 1
    %s85 = scalar_select %p82, %s83, %s84
    %p88 = pneg %p82
    %p89 = scmp.eq.s32.totalorder %s10, 1
    %p90 = por %p88, %p89
    %p91 = scmp.ne.s32.totalorder %s83, %s86
    %p92 = scmp.eq.s32.totalorder %s10, 0
    %p93 = por %p91, %p92
    %p94 = scmp.ne.s32.totalorder %s83, %s86
    %p95 = scmp.eq.s32.totalorder %s15, 1
    %p96 = por %p94, %p95
    %p97 = scmp.ne.s32.totalorder %s86, %s87
    %p98 = scmp.eq.s32.totalorder %s15, 0
    %p99 = por %p97, %p98
    %p100 = scmp.ne.s32.totalorder %s86, %s87
    %p101 = scmp.eq.s32.totalorder %s16, 1
    %p102 = por %p100, %p101
    %p104 = scmp.ne.s32.totalorder %s87, %s103
    %p105 = scmp.eq.s32.totalorder %s16, 0
    %p106 = por %p104, %p105
    %s107 = ssub.s32 %s10, %s17
    %p108 = scmp.eq.s32.totalorder %s107, 0
    %s110 = sadd.s32 %s109, 1
    %s111 = scalar_select %p108, %s109, %s110
    %p114 = pneg %p108
    %p115 = scmp.eq.s32.totalorder %s10, 1
    %p116 = por %p114, %p115
    %p117 = scmp.ne.s32.totalorder %s109, %s112
    %p118 = scmp.eq.s32.totalorder %s10, 0
    %p119 = por %p117, %p118
    %p120 = scmp.ne.s32.totalorder %s109, %s112
    %p121 = scmp.eq.s32.totalorder %s15, 1
    %p122 = por %p120, %p121
    %p123 = scmp.ne.s32.totalorder %s112, %s113
    %p124 = scmp.eq.s32.totalorder %s15, 0
    %p125 = por %p123, %p124
    %p126 = scmp.ne.s32.totalorder %s112, %s113
    %p127 = scmp.eq.s32.totalorder %s16, 1
    %p128 = por %p126, %p127
    %p130 = scmp.ne.s32.totalorder %s113, %s129
    %p131 = scmp.eq.s32.totalorder %s16, 0
    %p132 = por %p130, %p131
    %p133 = scmp.le.s32.totalorder 1, %s10
    %p134 = scmp.lt.s32.totalorder %s10, 3
    %p135 = pnand %p133, %p134
    %p136 = pneg %p135
    // Predicated region
    $region9: #{down_forward.3} parent=5 // pred_check
      _
    $region10: #{down_forward.3} parent=5 // pred_check_branch
      %138 = sbr.rel (%p135) target = $region12
    $region11: #{down_forward.3} parent=5 // pred_region
      %s139 = ssub.s32 %s10, 1
      // Predicated region
      $region13: #{down_forward.3} parent=11 // pred_check
        %p140 = pneg %p31
      $region14: #{down_forward.3} parent=11 // pred_check_branch
        %142 = sbr.rel (%p140) target = $region16
      $region15: #{down_forward.3} parent=11 // pred_region
        _
      $region16: #{down_forward.3} parent=11 // pred_fallthru
        _
      // Predicated region
      $region17: #{down_forward.3} parent=11 // pred_check
        %p143 = pneg %p52
      $region18: #{down_forward.3} parent=11 // pred_check_branch
        %145 = sbr.rel (%p143) target = $region20
      $region19: #{down_forward.3} parent=11 // pred_region
        _
      $region20: #{down_forward.3} parent=11 // pred_fallthru
        _
      // Predicated region
      $region21: #{down_forward.3} parent=11 // pred_check
        %p146 = pneg %p73
      $region22: #{down_forward.3} parent=11 // pred_check_branch
        %148 = sbr.rel (%p146) target = $region24
      $region23: #{down_forward.3} parent=11 // pred_region
        _
      $region24: #{down_forward.3} parent=11 // pred_fallthru
        _
    $region12: #{down_forward.3} parent=5 // pred_fallthru
      _
    %p149 = scmp.lt.s32.totalorder %s10, 2
    // Predicated region
    $region25: #{down_forward.3} parent=5 // pred_check
      %p150 = pneg %p149
    $region26: #{down_forward.3} parent=5 // pred_check_branch
      %152 = sbr.rel (%p150) target = $region28
    $region27: #{down_forward.3} parent=5 // pred_region
      // Predicated region
      $region29: #{down_forward.3} parent=27 // pred_check
        %p153 = pneg %p93
      $region30: #{down_forward.3} parent=27 // pred_check_branch
        %155 = sbr.rel (%p153) target = $region32
      $region31: #{down_forward.3} parent=27 // pred_region
        %p156 = scmp.lt.s32.totalorder %s10, 1
        %s157 = scalar_select %p156, %s10, 1
        %s158 = smul.addr %s157, 8
        %s159 = smul.addr %s158, 8
        %s160 = scalar_lea.vmem %s3, %s159
      $region32: #{down_forward.3} parent=27 // pred_fallthru
        _
    $region28: #{down_forward.3} parent=5 // pred_fallthru
      _
    %p161 = scmp.le.s32.totalorder 1, %s10
    %p162 = scmp.lt.s32.totalorder %s10, 3
    %p163 = pnand %p161, %p162
    %p164 = pneg %p163
    // Predicated region
    $region33: #{down_forward.3} parent=5 // pred_check
      _
    $region34: #{down_forward.3} parent=5 // pred_check_branch
      %166 = sbr.rel (%p163) target = $region36
    $region35: #{down_forward.3} parent=5 // pred_region
      %s167 = ssub.s32 %s10, 1
      %p168 = pneg %p31
      %p169 = pneg %p28
      %p170 = pneg %p52
      %p171 = pneg %p49
      %p172 = pneg %p73
      %p173 = pneg %p70
      %p174 = scmp.lt.s32.totalorder %s15, 1
      %s175 = scalar_select %p174, %s15, 1
      %s176 = smul.addr %s175, 8
      %s177 = smul.addr %s176, 8
      %s178 = scalar_lea.vmem %s3, %s177
      %p179 = pneg %p99
      %p180 = pneg %p96
      %p181 = pneg %p125
      %p182 = pneg %p122
      %p183 = scmp.lt.s32.totalorder %s15, 1
      %s184 = scalar_select %p183, %s15, 1
      %s185 = smul.addr %s184, 8
      %s186 = smul.addr %s185, 8
      %s187 = scalar_lea.vmem %s4, %s186
      %p188 = scmp.lt.s32.totalorder %s15, 1
      %s189 = scalar_select %p188, %s15, 1
      %s190 = smul.addr %s189, 8
      %s191 = smul.addr %s190, 8
      %s192 = scalar_lea.vmem %s3, %s191
      %p193 = scmp.lt.s32.totalorder %s15, 1
      %s194 = scalar_select %p193, %s15, 1
      %s195 = smul.addr %s194, 8
      %s196 = smul.addr %s195, 8
      %s197 = scalar_lea.vmem %s4, %s196
      %v198 = vld [vmem:[%s0] sm:$0x3]
      %v199 = vld [vmem:[%s0 + $0x2] sm:$0x3]
      %vm200 = vcmask 1041408
      %v201 = vsel %vm200, %v198, 0.0
      %v202 = vsel %vm200, %v199, 0.0
      %v203 = vadd.f32 %v201, %v202
      %v204 = vmul.f32 %v203, 0.0078125
      %v205 = vmul.f32 %v204, %v204
      %v207 = vrot.slane %v205, 7
      %v209 = vsub.f32 %v204, %v207
      %v210 = vld [vmem:[%s1] sm:$0x1]
      %v211 = vadd.f32 %v209, 1e-05
      %v212 = vrsqrt.pop %v211
      %v215 = vunpack.c.l.s4 1966171168
      %v216 = vunpack.c.0.s8 %v215
      %v217 = vlaneseq
      %v218 = vshrl.u32 %v217, 7
      %v219 = vsub.s32 %v216, %v218
      %v220 = vrot.slane %v212, %v219
      %v221 = vcombine.high %v220, %v220
      %v223 = vunpack.c.l.s4 1966171168
      %v224 = vunpack.c.0.s8 %v223
      %v225 = vlaneseq
      %v226 = vshrl.u32 %v225, 7
      %v227 = vsub.s32 %v224, %v226
      %v228 = vrot.slane %v221, %v227
      %v230 = vmul.f32 %v210, %v228
      %v231 = vld [vmem:[%s2] sm:$0x1]
      %v232 = vmul.f32 %v204, %v230
      %v233 = vsub.f32 %v231, %v232
      %v234 = vld [vmem:[%s192] sm:$0xff]
      %v235 = vld [vmem:[%s192 + $0x8] sm:$0xff]
      %v236 = vld [vmem:[%s192 + $0x10] sm:$0xff]
      %v237 = vld [vmem:[%s192 + $0x18] sm:$0xff]
      %v238 = vld [vmem:[%s192 + $0x20] sm:$0xff]
      %v239 = vld [vmem:[%s192 + $0x28] sm:$0xff]
      %v240 = vld [vmem:[%s192 + $0x30] sm:$0xff]
      %v241 = vld [vmem:[%s192 + $0x38] sm:$0xff]
      %v243 = vlaneseq
      %v244 = vshrl.u32 %v243, 7
      %v245 = vsub.s32 0, %v244
      %v246 = vrot.slane %v230, %v245
      %v248 = vmul.f32 %v234, %v246
      %v249 = vmul.f32 %v235, %v246
      %v250 = vmul.f32 %v236, %v246
      %v251 = vmul.f32 %v237, %v246
      %v252 = vmul.f32 %v238, %v246
      %v253 = vmul.f32 %v239, %v246
      %v254 = vmul.f32 %v240, %v246
      %v255 = vmul.f32 %v241, %v246
      %v257 = vlaneseq
      %v258 = vshrl.u32 %v257, 7
      %v259 = vsub.s32 0, %v258
      %v260 = vrot.slane %v233, %v259
      %v262 = vadd.f32 %v248, %v260
      %v263 = vadd.f32 %v249, %v260
      %v264 = vadd.f32 %v250, %v260
      %v265 = vadd.f32 %v251, %v260
      %v266 = vadd.f32 %v252, %v260
      %v267 = vadd.f32 %v253, %v260
      %v268 = vadd.f32 %v254, %v260
      %v269 = vadd.f32 %v255, %v260
      %270 = vst [vmem:[%s197] sm:$0xff] %v262
      %271 = vst [vmem:[%s197 + $0x8] sm:$0xff] %v263
      %272 = vst [vmem:[%s197 + $0x10] sm:$0xff] %v264
      %273 = vst [vmem:[%s197 + $0x18] sm:$0xff] %v265
      %274 = vst [vmem:[%s197 + $0x20] sm:$0xff] %v266
      %275 = vst [vmem:[%s197 + $0x28] sm:$0xff] %v267
      %276 = vst [vmem:[%s197 + $0x30] sm:$0xff] %v268
      %277 = vst [vmem:[%s197 + $0x38] sm:$0xff] %v269
      %p278 = scmp.lt.s32.totalorder %s15, 1
      %s279 = scalar_select %p278, %s15, 1
      %s280 = smul.addr %s279, 8
      %s281 = smul.addr %s280, 8
      %s282 = scalar_lea.vmem %s4, %s281
      // Predicated region
      $region37: #{down_forward.3} parent=35 // pred_check
        %p283 = pneg %p122
      $region38: #{down_forward.3} parent=35 // pred_check_branch
        %285 = sbr.rel (%p283) target = $region40
      $region39: #{down_forward.3} parent=35 // pred_region
        _
      $region40: #{down_forward.3} parent=35 // pred_fallthru
        _
    $region36: #{down_forward.3} parent=5 // pred_fallthru
      _
    %p286 = scmp.le.s32.totalorder 2, %s10
    // Predicated region
    $region41: #{down_forward.3} parent=5 // pred_check
      %p287 = pneg %p286
    $region42: #{down_forward.3} parent=5 // pred_check_branch
      %289 = sbr.rel (%p287) target = $region44
    $region43: #{down_forward.3} parent=5 // pred_region
      %s290 = ssub.s32 %s10, 2
      // Predicated region
      $region45: #{down_forward.3} parent=43 // pred_check
        %p291 = pneg %p128
      $region46: #{down_forward.3} parent=43 // pred_check_branch
        %293 = sbr.rel (%p291) target = $region48
      $region47: #{down_forward.3} parent=43 // pred_region
        %p294 = scmp.lt.s32.totalorder %s16, 1
        %s295 = scalar_select %p294, %s16, 1
        %s296 = smul.addr %s295, 8
        %s297 = smul.addr %s296, 8
        %s298 = scalar_lea.vmem %s4, %s297
      $region48: #{down_forward.3} parent=43 // pred_fallthru
        _
    $region44: #{down_forward.3} parent=5 // pred_fallthru
      _
  $region6: #{down_forward.3} parent=0 // loop_footer
    %s14 = sadd.s32 1, %s10
  $region7: #{down_forward.3} parent=0 // loop_footer_branch
    %9 = sbr.rel target = $region3
  $region8: #{down_forward.3} parent=0 // loop_exit
    _

// kernel: down_forward.2
$region0: #{down_forward.2}
  #allocation0 [shape = 'u32[]', space=smem, size = 0x4, offset = 0x4, fixed_abs, tag = 'smem constant byte address 0x4 - core index']
  #allocation1 [shape = 'u32[144,128]{1,0:T(1,128)}', space=vmem, size = 0x12000, scoped, tag = 'internal scratch']
  #allocation2 [shape = 'bf16[10,10,4]{2,1,0:T(8,128)(2,1)}', space=vmem, size = 0xa000, scoped, tag = 'scratch operand']
  #allocation3 [shape = 'bf16[8,8,36]{2,1,0:T(8,128)(2,1)}', space=vmem, size = 0x4000, scoped, tag = 'scratch operand']
  %s0 = inlined_call_operand.vmem [shape: f32[2,16,8,8], index: 0, kind: input, shape index: {}]
  %s1 = inlined_call_operand.vmem [shape: bf16[36,128], index: 1, kind: input, shape index: {}]
  %s2 = inlined_call_operand.vmem [shape: f32[2,64,128], index: 2, kind: output, shape index: {0}]
  %s3 = inlined_call_operand.vmem [shape: f32[2,2,128], index: 3, kind: output, shape index: {1}]
  %4 = xla_tuple %s2, %s3
  %s5 = sld [smem:[#allocation0]]
  $region49: #{down_forward.2} parent=0
    _
  %s7 = ssub.s32 1, %s5
  %s8 = scalar_select 0, %s7, %s5
  loop: start=0, step=1, limit=4
  $region2: #{down_forward.2} parent=0 // loop_pre_header
    _
  $region3: #{down_forward.2} parent=0 // loop_header
    %s10 = sphi 0, %s14
    %p11 = scmp.ge.s32.totalorder %s10, 4
    %s20 = sphi 0, %s22
    %s23 = sphi 0, %s20
    %s24 = sphi 0, %s23
    %s40 = sphi 0, %s24
    %s44 = sphi 0, %s44
    %s46 = sphi 0, %s44
    %s47 = sphi 0, %s46
    %s61 = sphi 0, %s47
    %s67 = sphi 0, %s69
    %s70 = sphi 0, %s67
    %s71 = sphi 0, %s70
    %s87 = sphi 0, %s71
    %s93 = sphi 0, %s95
    %s96 = sphi 0, %s93
    %s97 = sphi 0, %s96
    %s113 = sphi 0, %s97
  $region4: #{down_forward.2} parent=0 // loop_header_branch
    %13 = sbr.rel (%p11) target = $region8
  $region5: #{down_forward.2} parent=0 // loop_body
    %s15 = ssub.s32 %s10, 1
    %s16 = ssub.s32 %s10, 2
    %s17 = sadd.s32 %s10, 1
    %s18 = ssub.s32 %s10, %s17
    %p19 = scmp.eq.s32.totalorder %s18, 0
    %s21 = sadd.s32 %s20, 1
    %s22 = scalar_select %p19, %s20, %s21
    %p25 = pneg %p19
    %p26 = scmp.eq.s32.totalorder %s10, 1
    %p27 = por %p25, %p26
    %p28 = scmp.ne.s32.totalorder %s20, %s23
    %p29 = scmp.eq.s32.totalorder %s10, 0
    %p30 = por %p28, %p29
    %p31 = scmp.ne.s32.totalorder %s20, %s23
    %p32 = scmp.eq.s32.totalorder %s15, 1
    %p33 = por %p31, %p32
    %p34 = scmp.ne.s32.totalorder %s23, %s24
    %p35 = scmp.eq.s32.totalorder %s15, 0
    %p36 = por %p34, %p35
    %p37 = scmp.ne.s32.totalorder %s23, %s24
    %p38 = scmp.eq.s32.totalorder %s16, 1
    %p39 = por %p37, %p38
    %p41 = scmp.ne.s32.totalorder %s24, %s40
    %p42 = scmp.eq.s32.totalorder %s16, 0
    %p43 = por %p41, %p42
    %s45 = sadd.s32 %s44, 1
    %p48 = scmp.eq.s32.totalorder %s10, 1
    %p49 = scmp.ne.s32.totalorder %s44, %s46
    %p50 = scmp.eq.s32.totalorder %s10, 0
    %p51 = por %p49, %p50
    %p52 = scmp.ne.s32.totalorder %s44, %s46
    %p53 = scmp.eq.s32.totalorder %s15, 1
    %p54 = por %p52, %p53
    %p55 = scmp.ne.s32.totalorder %s46, %s47
    %p56 = scmp.eq.s32.totalorder %s15, 0
    %p57 = por %p55, %p56
    %p58 = scmp.ne.s32.totalorder %s46, %s47
    %p59 = scmp.eq.s32.totalorder %s16, 1
    %p60 = por %p58, %p59
    %p62 = scmp.ne.s32.totalorder %s47, %s61
    %p63 = scmp.eq.s32.totalorder %s16, 0
    %p64 = por %p62, %p63
    %s65 = ssub.s32 %s10, %s17
    %p66 = scmp.eq.s32.totalorder %s65, 0
    %s68 = sadd.s32 %s67, 1
    %s69 = scalar_select %p66, %s67, %s68
    %p72 = pneg %p66
    %p73 = scmp.eq.s32.totalorder %s10, 1
    %p74 = por %p72, %p73
    %p75 = scmp.ne.s32.totalorder %s67, %s70
    %p76 = scmp.eq.s32.totalorder %s10, 0
    %p77 = por %p75, %p76
    %p78 = scmp.ne.s32.totalorder %s67, %s70
    %p79 = scmp.eq.s32.totalorder %s15, 1
    %p80 = por %p78, %p79
    %p81 = scmp.ne.s32.totalorder %s70, %s71
    %p82 = scmp.eq.s32.totalorder %s15, 0
    %p83 = por %p81, %p82
    %p84 = scmp.ne.s32.totalorder %s70, %s71
    %p85 = scmp.eq.s32.totalorder %s16, 1
    %p86 = por %p84, %p85
    %p88 = scmp.ne.s32.totalorder %s71, %s87
    %p89 = scmp.eq.s32.totalorder %s16, 0
    %p90 = por %p88, %p89
    %s91 = ssub.s32 %s10, %s17
    %p92 = scmp.eq.s32.totalorder %s91, 0
    %s94 = sadd.s32 %s93, 1
    %s95 = scalar_select %p92, %s93, %s94
    %p98 = pneg %p92
    %p99 = scmp.eq.s32.totalorder %s10, 1
    %p100 = por %p98, %p99
    %p101 = scmp.ne.s32.totalorder %s93, %s96
    %p102 = scmp.eq.s32.totalorder %s10, 0
    %p103 = por %p101, %p102
    %p104 = scmp.ne.s32.totalorder %s93, %s96
    %p105 = scmp.eq.s32.totalorder %s15, 1
    %p106 = por %p104, %p105
    %p107 = scmp.ne.s32.totalorder %s96, %s97
    %p108 = scmp.eq.s32.totalorder %s15, 0
    %p109 = por %p107, %p108
    %p110 = scmp.ne.s32.totalorder %s96, %s97
    %p111 = scmp.eq.s32.totalorder %s16, 1
    %p112 = por %p110, %p111
    %p114 = scmp.ne.s32.totalorder %s97, %s113
    %p115 = scmp.eq.s32.totalorder %s16, 0
    %p116 = por %p114, %p115
    %p117 = scmp.le.s32.totalorder 1, %s10
    %p118 = scmp.lt.s32.totalorder %s10, 3
    %p119 = pnand %p117, %p118
    %p120 = pneg %p119
    // Predicated region
    $region9: #{down_forward.2} parent=5 // pred_check
      _
    $region10: #{down_forward.2} parent=5 // pred_check_branch
      %122 = sbr.rel (%p119) target = $region12
    $region11: #{down_forward.2} parent=5 // pred_region
      %s123 = ssub.s32 %s10, 1
      // Predicated region
      $region13: #{down_forward.2} parent=11 // pred_check
        %p124 = pneg %p57
      $region14: #{down_forward.2} parent=11 // pred_check_branch
        %126 = sbr.rel (%p124) target = $region16
      $region15: #{down_forward.2} parent=11 // pred_region
        _
      $region16: #{down_forward.2} parent=11 // pred_fallthru
        _
    $region12: #{down_forward.2} parent=5 // pred_fallthru
      _
    %p127 = scmp.lt.s32.totalorder %s10, 2
    // Predicated region
    $region17: #{down_forward.2} parent=5 // pred_check
      %p128 = pneg %p127
    $region18: #{down_forward.2} parent=5 // pred_check_branch
      %130 = sbr.rel (%p128) target = $region20
    $region19: #{down_forward.2} parent=5 // pred_region
      // Predicated region
      $region21: #{down_forward.2} parent=19 // pred_check
        %p131 = pneg %p30
      $region22: #{down_forward.2} parent=19 // pred_check_branch
        %133 = sbr.rel (%p131) target = $region24
      $region23: #{down_forward.2} parent=19 // pred_region
        %p134 = scmp.lt.s32.totalorder %s10, 1
        %s135 = scalar_select %p134, %s10, 1
        %s136 = smul.addr %s135, 16
        %s137 = smul.addr %s136, 8
        %s138 = scalar_lea.vmem %s0, %s137
      $region24: #{down_forward.2} parent=19 // pred_fallthru
        _
    $region20: #{down_forward.2} parent=5 // pred_fallthru
      _
    %p139 = scmp.le.s32.totalorder 1, %s10
    %p140 = scmp.lt.s32.totalorder %s10, 3
    %p141 = pnand %p139, %p140
    %p142 = pneg %p141
    // Predicated region
    $region25: #{down_forward.2} parent=5 // pred_check
      _
    $region26: #{down_forward.2} parent=5 // pred_check_branch
      %144 = sbr.rel (%p141) target = $region28
    $region27: #{down_forward.2} parent=5 // pred_region
      %s145 = ssub.s32 %s10, 1
      %p146 = scmp.lt.s32.totalorder %s15, 1
      %s147 = scalar_select %p146, %s15, 1
      %s148 = smul.addr %s147, 16
      %s149 = smul.addr %s148, 8
      %s150 = scalar_lea.vmem %s0, %s149
      %p151 = pneg %p36
      %p152 = pneg %p33
      %p153 = pneg %p57
      %p154 = pneg %p54
      %p155 = pneg %p83
      %p156 = pneg %p80
      %p157 = scmp.lt.s32.totalorder %s15, 1
      %s158 = scalar_select %p157, %s15, 1
      %s159 = smul.addr %s158, 8
      %s160 = smul.addr %s159, 8
      %s161 = scalar_lea.vmem %s2, %s160
      %p162 = pneg %p109
      %p163 = pneg %p106
      %p164 = scmp.lt.s32.totalorder %s15, 1
      %s165 = scalar_select %p164, %s15, 1
      %s166 = smul.addr %s165, 2
      %s167 = scalar_lea.vmem %s3, %s166
      %p168 = scmp.lt.s32.totalorder %s15, 1
      %s169 = scalar_select %p168, %s15, 1
      %s170 = smul.addr %s169, 16
      %s171 = smul.addr %s170, 8
      %s172 = scalar_lea.vmem %s0, %s171
      %p173 = scmp.lt.s32.totalorder %s15, 1
      %s174 = scalar_select %p173, %s15, 1
      %s175 = smul.addr %s174, 8
      %s176 = smul.addr %s175, 8
      %s177 = scalar_lea.vmem %s2, %s176
      %p178 = scmp.lt.s32.totalorder %s15, 1
      %s179 = scalar_select %p178, %s15, 1
      %s180 = smul.addr %s179, 2
      %s181 = scalar_lea.vmem %s3, %s180
      %v183 = vld [vmem:[%s172] sm:$0xff]
      %v184 = vld [vmem:[%s172 + $0x8] sm:$0xff]
      %v185 = vld [vmem:[%s172 + $0x10] sm:$0xff]
      %v186 = vld [vmem:[%s172 + $0x18] sm:$0xff]
      %v187 = vld [vmem:[%s172 + $0x20] sm:$0xff]
      %v188 = vld [vmem:[%s172 + $0x28] sm:$0xff]
      %v189 = vld [vmem:[%s172 + $0x30] sm:$0xff]
      %v190 = vld [vmem:[%s172 + $0x38] sm:$0xff]
      %v191 = vld [vmem:[%s172 + $0x40] sm:$0xff]
      %v192 = vld [vmem:[%s172 + $0x48] sm:$0xff]
      %v193 = vld [vmem:[%s172 + $0x50] sm:$0xff]
      %v194 = vld [vmem:[%s172 + $0x58] sm:$0xff]
      %v195 = vld [vmem:[%s172 + $0x60] sm:$0xff]
      %v196 = vld [vmem:[%s172 + $0x68] sm:$0xff]
      %v197 = vld [vmem:[%s172 + $0x70] sm:$0xff]
      %v198 = vld [vmem:[%s172 + $0x78] sm:$0xff]
      %215 = vrot.lane.b32.xlu0 %v183, 124
      %v216 = vpop.permute.xlu0 %215
      %217 = vrot.lane.b32.xlu0 %v184, 124
      %v218 = vpop.permute.xlu0 %217
      %219 = vrot.lane.b32.xlu0 %v185, 124
      %v220 = vpop.permute.xlu0 %219
      %221 = vrot.lane.b32.xlu0 %v186, 124
      %v222 = vpop.permute.xlu0 %221
      %223 = vrot.lane.b32.xlu0 %v187, 124
      %v224 = vpop.permute.xlu0 %223
      %225 = vrot.lane.b32.xlu0 %v188, 124
      %v226 = vpop.permute.xlu0 %225
      %227 = vrot.lane.b32.xlu0 %v189, 124
      %v228 = vpop.permute.xlu0 %227
      %229 = vrot.lane.b32.xlu0 %v190, 124
      %v230 = vpop.permute.xlu0 %229
      %231 = vrot.lane.b32.xlu0 %v191, 124
      %v232 = vpop.permute.xlu0 %231
      %233 = vrot.lane.b32.xlu0 %v192, 124
      %v234 = vpop.permute.xlu0 %233
      %235 = vrot.lane.b32.xlu0 %v193, 124
      %v236 = vpop.permute.xlu0 %235
      %237 = vrot.lane.b32.xlu0 %v194, 124
      %v238 = vpop.permute.xlu0 %237
      %239 = vrot.lane.b32.xlu0 %v195, 124
      %v240 = vpop.permute.xlu0 %239
      %241 = vrot.lane.b32.xlu0 %v196, 124
      %v242 = vpop.permute.xlu0 %241
      %243 = vrot.lane.b32.xlu0 %v197, 124
      %v244 = vpop.permute.xlu0 %243
      %245 = vrot.lane.b32.xlu0 %v198, 124
      %v246 = vpop.permute.xlu0 %245
      %v263 = vmax.f32 %v183, %v216
      %v264 = vmax.f32 %v184, %v218
      %v265 = vmax.f32 %v185, %v220
      %v266 = vmax.f32 %v186, %v222
      %v267 = vmax.f32 %v187, %v224
      %v268 = vmax.f32 %v188, %v226
      %v269 = vmax.f32 %v189, %v228
      %v270 = vmax.f32 %v190, %v230
      %v271 = vmax.f32 %v191, %v232
      %v272 = vmax.f32 %v192, %v234
      %v273 = vmax.f32 %v193, %v236
      %v274 = vmax.f32 %v194, %v238
      %v275 = vmax.f32 %v195, %v240
      %v276 = vmax.f32 %v196, %v242
      %v277 = vmax.f32 %v197, %v244
      %v278 = vmax.f32 %v198, %v246
      %v279 = vmax.f32 %v263, %v264
      %v280 = vmax.f32 %v265, %v266
      %v281 = vmax.f32 %v267, %v268
      %v282 = vmax.f32 %v269, %v270
      %v283 = vmax.f32 %v271, %v272
      %v284 = vmax.f32 %v273, %v274
      %v285 = vmax.f32 %v275, %v276
      %v286 = vmax.f32 %v277, %v278
      %vm287 = vcmask 27648
      %288 = vst.msk [vmem:[#allocation2] sm:$0xf] %vm287, 0
      %vm289 = vcmask 24576
      %290 = vst.msk [vmem:[#allocation2 + $0x4] sm:$0x1] %vm289, 0
      %s291 = scalar_lea.vmem [#allocation2], 72
      %292 = vst.msk [vmem:[%s291] sm:$0xf] %vm287, 0
      %293 = vst.msk [vmem:[%s291 + $0x4] sm:$0x1] %vm289, 0
      %vm294 = vcmask 24576
      %vm295 = vsmask.f32 256
      %vm296 = vmand %vm294, %vm295
      %v297 = vld [vmem:[#allocation2] sm:$0x1]
      %v298 = vsel %vm296, 0, %v297
      %299 = vst [vmem:[#allocation2] sm:$0x1] %v298
      %v300 = vld [vmem:[#allocation2 + $0x8] sm:$0x1]
      %v301 = vsel %vm296, 0, %v300
      %302 = vst [vmem:[#allocation2 + $0x8] sm:$0x1] %v301
      %v303 = vld [vmem:[#allocation2 + $0x10] sm:$0x1]
      %v304 = vsel %vm296, 0, %v303
      %305 = vst [vmem:[#allocation2 + $0x10] sm:$0x1] %v304
      %v306 = vld [vmem:[#allocation2 + $0x18] sm:$0x1]
      %v307 = vsel %vm296, 0, %v306
      %308 = vst [vmem:[#allocation2 + $0x18] sm:$0x1] %v307
      %v309 = vld [vmem:[#allocation2 + $0x20] sm:$0x1]
      %v310 = vsel %vm296, 0, %v309
      %311 = vst [vmem:[#allocation2 + $0x20] sm:$0x1] %v310
      %v312 = vld [vmem:[#allocation2 + $0x28] sm:$0x1]
      %v313 = vsel %vm296, 0, %v312
      %314 = vst [vmem:[#allocation2 + $0x28] sm:$0x1] %v313
      %v315 = vld [vmem:[#allocation2 + $0x30] sm:$0x1]
      %v316 = vsel %vm296, 0, %v315
      %317 = vst [vmem:[#allocation2 + $0x30] sm:$0x1] %v316
      %v318 = vld [vmem:[#allocation2 + $0x38] sm:$0x1]
      %v319 = vsel %vm296, 0, %v318
      %320 = vst [vmem:[#allocation2 + $0x38] sm:$0x1] %v319
      %v321 = vld [vmem:[#allocation2 + $0x40] sm:$0x1]
      %v322 = vsel %vm296, 0, %v321
      %323 = vst [vmem:[#allocation2 + $0x40] sm:$0x1] %v322
      %v324 = vld [vmem:[#allocation2 + $0x48] sm:$0x1]
      %v325 = vsel %vm296, 0, %v324
      %326 = vst [vmem:[#allocation2 + $0x48] sm:$0x1] %v325
      %vm327 = vsmask.f32 7938
      %vm328 = vmand %vm294, %vm327
      %v329 = vld [vmem:[#allocation2 + $0x4] sm:$0x1]
      %v330 = vsel %vm328, 0, %v329
      %331 = vst [vmem:[#allocation2 + $0x4] sm:$0x1] %v330
      %v332 = vld [vmem:[#allocation2 + $0xc] sm:$0x1]
      %v333 = vsel %vm328, 0, %v332
      %334 = vst [vmem:[#allocation2 + $0xc] sm:$0x1] %v333
      %v335 = vld [vmem:[#allocation2 + $0x14] sm:$0x1]
      %v336 = vsel %vm328, 0, %v335
      %337 = vst [vmem:[#allocation2 + $0x14] sm:$0x1] %v336
      %v338 = vld [vmem:[#allocation2 + $0x1c] sm:$0x1]
      %v339 = vsel %vm328, 0, %v338
      %340 = vst [vmem:[#allocation2 + $0x1c] sm:$0x1] %v339
      %v341 = vld [vmem:[#allocation2 + $0x24] sm:$0x1]
      %v342 = vsel %vm328, 0, %v341
      %343 = vst [vmem:[#allocation2 + $0x24] sm:$0x1] %v342
      %v344 = vld [vmem:[#allocation2 + $0x2c] sm:$0x1]
      %v345 = vsel %vm328, 0, %v344
      %346 = vst [vmem:[#allocation2 + $0x2c] sm:$0x1] %v345
      %v347 = vld [vmem:[#allocation2 + $0x34] sm:$0x1]
      %v348 = vsel %vm328, 0, %v347
      %349 = vst [vmem:[#allocation2 + $0x34] sm:$0x1] %v348
      %v350 = vld [vmem:[#allocation2 + $0x3c] sm:$0x1]
      %v351 = vsel %vm328, 0, %v350
      %352 = vst [vmem:[#allocation2 + $0x3c] sm:$0x1] %v351
      %v353 = vld [vmem:[#allocation2 + $0x44] sm:$0x1]
      %v354 = vsel %vm328, 0, %v353
      %355 = vst [vmem:[#allocation2 + $0x44] sm:$0x1] %v354
      %v356 = vld [vmem:[#allocation2 + $0x4c] sm:$0x1]
      %v357 = vsel %vm328, 0, %v356
      %358 = vst [vmem:[#allocation2 + $0x4c] sm:$0x1] %v357
      %v359 = vpack.c.bf16 %v279, %v279
      %v360 = vpack.c.bf16 %v280, %v280
      %v361 = vpack.c.bf16 %v281, %v281
      %v362 = vpack.c.bf16 %v282, %v282
      %v363 = vpack.c.bf16 %v283, %v283
      %v364 = vpack.c.bf16 %v284, %v284
      %v365 = vpack.c.bf16 %v285, %v285
      %v366 = vpack.c.bf16 %v286, %v286
      %v375 = vunpack.c.l.b16 %v359
      %v376 = vunpack.c.l.b16 %v360
      %v377 = vunpack.c.l.b16 %v361
      %v378 = vunpack.c.l.b16 %v362
      %v379 = vunpack.c.l.b16 %v363
      %v380 = vunpack.c.l.b16 %v364
      %v381 = vunpack.c.l.b16 %v365
      %v382 = vunpack.c.l.b16 %v366
      %v383 = vpack.c.b16 %v375, %v375
      %v384 = vpack.c.b16 %v376, %v376
      %v385 = vpack.c.b16 %v377, %v377
      %v386 = vpack.c.b16 %v378, %v378
      %v387 = vpack.c.b16 %v379, %v379
      %v388 = vpack.c.b16 %v380, %v380
      %v389 = vpack.c.b16 %v381, %v381
      %v390 = vpack.c.b16 %v382, %v382
      %v392 = vshrl.u32 %v383, 16
      %v394 = vrot.slane %v392, 7
      %v395 = vshll.u32 %v383, 16
      %v397 = vor.u32 %v394, %v395
      %v398 = vrot.slane %v394, 4
      %v400 = vshrl.u32 %v384, 16
      %v402 = vrot.slane %v400, 7
      %v403 = vshll.u32 %v384, 16
      %v405 = vor.u32 %v402, %v403
      %v406 = vrot.slane %v402, 4
      %v408 = vshrl.u32 %v385, 16
      %v410 = vrot.slane %v408, 7
      %v411 = vshll.u32 %v385, 16
      %v413 = vor.u32 %v410, %v411
      %v414 = vrot.slane %v410, 4
      %v416 = vshrl.u32 %v386, 16
      %v418 = vrot.slane %v416, 7
      %v419 = vshll.u32 %v386, 16
      %v421 = vor.u32 %v418, %v419
      %v422 = vrot.slane %v418, 4
      %v424 = vshrl.u32 %v387, 16
      %v426 = vrot.slane %v424, 7
      %v427 = vshll.u32 %v387, 16
      %v429 = vor.u32 %v426, %v427
      %v430 = vrot.slane %v426, 4
      %v432 = vshrl.u32 %v388, 16
      %v434 = vrot.slane %v432, 7
      %v435 = vshll.u32 %v388, 16
      %v437 = vor.u32 %v434, %v435
      %v438 = vrot.slane %v434, 4
      %v440 = vshrl.u32 %v389, 16
      %v442 = vrot.slane %v440, 7
      %v443 = vshll.u32 %v389, 16
      %v445 = vor.u32 %v442, %v443
      %v446 = vrot.slane %v442, 4
      %v448 = vshrl.u32 %v390, 16
      %v450 = vrot.slane %v448, 7
      %v451 = vshll.u32 %v390, 16
      %v453 = vor.u32 %v450, %v451
      %v454 = vrot.slane %v450, 4
      %s471 = scalar_lea.vmem [#allocation2], 8
      %vm472 = vcmask 27648
      %vm473 = vmand %vm472, %vm327
      %v474 = vld [vmem:[%s471] sm:$0xf]
      %v475 = vsel %vm473, %v397, %v474
      %476 = vst [vmem:[%s471] sm:$0xf] %v475
      %v477 = vld [vmem:[%s471 + $0x4] sm:$0x1]
      %v478 = vsel %vm296, %v398, %v477
      %479 = vst [vmem:[%s471 + $0x4] sm:$0x1] %v478
      %v480 = vld [vmem:[%s471 + $0x8] sm:$0xf]
      %v481 = vsel %vm473, %v405, %v480
      %482 = vst [vmem:[%s471 + $0x8] sm:$0xf] %v481
      %v483 = vld [vmem:[%s471 + $0xc] sm:$0x1]
      %v484 = vsel %vm296, %v406, %v483
      %485 = vst [vmem:[%s471 + $0xc] sm:$0x1] %v484
      %v486 = vld [vmem:[%s471 + $0x10] sm:$0xf]
      %v487 = vsel %vm473, %v413, %v486
      %488 = vst [vmem:[%s471 + $0x10] sm:$0xf] %v487
      %v489 = vld [vmem:[%s471 + $0x14] sm:$0x1]
      %v490 = vsel %vm296, %v414, %v489
      %491 = vst [vmem:[%s471 + $0x14] sm:$0x1] %v490
      %v492 = vld [vmem:[%s471 + $0x18] sm:$0xf]
      %v493 = vsel %vm473, %v421, %v492
      %494 = vst [vmem:[%s471 + $0x18] sm:$0xf] %v493
      %v495 = vld [vmem:[%s471 + $0x1c] sm:$0x1]
      %v496 = vsel %vm296, %v422, %v495
      %497 = vst [vmem:[%s471 + $0x1c] sm:$0x1] %v496
      %v498 = vld [vmem:[%s471 + $0x20] sm:$0xf]
      %v499 = vsel %vm473, %v429, %v498
      %500 = vst [vmem:[%s471 + $0x20] sm:$0xf] %v499
      %v501 = vld [vmem:[%s471 + $0x24] sm:$0x1]
      %v502 = vsel %vm296, %v430, %v501
      %503 = vst [vmem:[%s471 + $0x24] sm:$0x1] %v502
      %v504 = vld [vmem:[%s471 + $0x28] sm:$0xf]
      %v505 = vsel %vm473, %v437, %v504
      %506 = vst [vmem:[%s471 + $0x28] sm:$0xf] %v505
      %v507 = vld [vmem:[%s471 + $0x2c] sm:$0x1]
      %v508 = vsel %vm296, %v438, %v507
      %509 = vst [vmem:[%s471 + $0x2c] sm:$0x1] %v508
      %v510 = vld [vmem:[%s471 + $0x30] sm:$0xf]
      %v511 = vsel %vm473, %v445, %v510
      %512 = vst [vmem:[%s471 + $0x30] sm:$0xf] %v511
      %v513 = vld [vmem:[%s471 + $0x34] sm:$0x1]
      %v514 = vsel %vm296, %v446, %v513
      %515 = vst [vmem:[%s471 + $0x34] sm:$0x1] %v514
      %v516 = vld [vmem:[%s471 + $0x38] sm:$0xf]
      %v517 = vsel %vm473, %v453, %v516
      %518 = vst [vmem:[%s471 + $0x38] sm:$0xf] %v517
      %v519 = vld [vmem:[%s471 + $0x3c] sm:$0x1]
      %v520 = vsel %vm296, %v454, %v519
      %521 = vst [vmem:[%s471 + $0x3c] sm:$0x1] %v520
      %v522 = vld [vmem:[#allocation2] sm:$0xf]
      %v523 = vld [vmem:[#allocation2 + $0x8] sm:$0xf]
      %v524 = vld [vmem:[#allocation2 + $0x10] sm:$0xf]
      %v525 = vld [vmem:[#allocation2 + $0x18] sm:$0xf]
      %v526 = vld [vmem:[#allocation2 + $0x20] sm:$0xf]
      %v527 = vld [vmem:[#allocation2 + $0x28] sm:$0xf]
      %v528 = vld [vmem:[#allocation2 + $0x30] sm:$0xf]
      %v529 = vld [vmem:[#allocation2 + $0x38] sm:$0xf]
      %530 = vst.msk [vmem:[#allocation3] sm:$0xf] %vm287, %v522
      %531 = vst.msk [vmem:[#allocation3 + $0x4] sm:$0xf] %vm287, %v523
      %532 = vst.msk [vmem:[#allocation3 + $0x8] sm:$0xf] %vm287, %v524
      %533 = vst.msk [vmem:[#allocation3 + $0xc] sm:$0xf] %vm287, %v525
      %534 = vst.msk [vmem:[#allocation3 + $0x10] sm:$0xf] %vm287, %v526
      %535 = vst.msk [vmem:[#allocation3 + $0x14] sm:$0xf] %vm287, %v527
      %536 = vst.msk [vmem:[#allocation3 + $0x18] sm:$0xf] %vm287, %v528
      %537 = vst.msk [vmem:[#allocation3 + $0x1c] sm:$0xf] %vm287, %v529
      %v538 = vld [vmem:[#allocation2] sm:$0xf]
      %v539 = vld [vmem:[#allocation2 + $0x4] sm:$0x1]
      %v540 = vld [vmem:[#allocation2 + $0x8] sm:$0xf]
      %v541 = vld [vmem:[#allocation2 + $0xc] sm:$0x1]
      %v542 = vld [vmem:[#allocation2 + $0x10] sm:$0xf]
      %v543 = vld [vmem:[#allocation2 + $0x14] sm:$0x1]
      %v544 = vld [vmem:[#allocation2 + $0x18] sm:$0xf]
      %v545 = vld [vmem:[#allocation2 + $0x1c] sm:$0x1]
      %v546 = vld [vmem:[#allocation2 + $0x20] sm:$0xf]
      %v547 = vld [vmem:[#allocation2 + $0x24] sm:$0x1]
      %v548 = vld [vmem:[#allocation2 + $0x28] sm:$0xf]
      %v549 = vld [vmem:[#allocation2 + $0x2c] sm:$0x1]
      %v550 = vld [vmem:[#allocation2 + $0x30] sm:$0xf]
      %v551 = vld [vmem:[#allocation2 + $0x34] sm:$0x1]
      %v552 = vld [vmem:[#allocation2 + $0x38] sm:$0xf]
      %v553 = vld [vmem:[#allocation2 + $0x3c] sm:$0x1]
      %vm554 = vsmask.f32 3328
      %vm555 = vsmask.f32 7440
      %vm556 = vmor %vm554, %vm555
      %v558 = vshrl.u32 %v538, 16
      %v560 = vrot.slane %v558, 4
      %v561 = vshll.u32 %v538, 16
      %v563 = vrot.slane %v561, 5
      %v564 = vor.u32 %v560, %v563
      %v565 = vrot.slane %v564, 4
      %v567 = vshll.u32 %v539, 16
      %v569 = vrot.slane %v567, 5
      %v570 = vsel %vm556, %v565, %v569
      %v572 = vshrl.u32 %v540, 16
      %v574 = vrot.slane %v572, 4
      %v575 = vshll.u32 %v540, 16
      %v577 = vrot.slane %v575, 5
      %v578 = vor.u32 %v574, %v577
      %v579 = vrot.slane %v578, 4
      %v581 = vshll.u32 %v541, 16
      %v583 = vrot.slane %v581, 5
      %v584 = vsel %vm556, %v579, %v583
      %v586 = vshrl.u32 %v542, 16
      %v588 = vrot.slane %v586, 4
      %v589 = vshll.u32 %v542, 16
      %v591 = vrot.slane %v589, 5
      %v592 = vor.u32 %v588, %v591
      %v593 = vrot.slane %v592, 4
      %v595 = vshll.u32 %v543, 16
      %v597 = vrot.slane %v595, 5
      %v598 = vsel %vm556, %v593, %v597
      %v600 = vshrl.u32 %v544, 16
      %v602 = vrot.slane %v600, 4
      %v603 = vshll.u32 %v544, 16
      %v605 = vrot.slane %v603, 5
      %v606 = vor.u32 %v602, %v605
      %v607 = vrot.slane %v606, 4
      %v609 = vshll.u32 %v545, 16
      %v611 = vrot.slane %v609, 5
      %v612 = vsel %vm556, %v607, %v611
      %v614 = vshrl.u32 %v546, 16
      %v616 = vrot.slane %v614, 4
      %v617 = vshll.u32 %v546, 16
      %v619 = vrot.slane %v617, 5
      %v620 = vor.u32 %v616, %v619
      %v621 = vrot.slane %v620, 4
      %v623 = vshll.u32 %v547, 16
      %v625 = vrot.slane %v623, 5
      %v626 = vsel %vm556, %v621, %v625
      %v628 = vshrl.u32 %v548, 16
      %v630 = vrot.slane %v628, 4
      %v631 = vshll.u32 %v548, 16
      %v633 = vrot.slane %v631, 5
      %v634 = vor.u32 %v630, %v633
      %v635 = vrot.slane %v634, 4
      %v637 = vshll.u32 %v549, 16
      %v639 = vrot.slane %v637, 5
      %v640 = vsel %vm556, %v635, %v639
      %v642 = vshrl.u32 %v550, 16
      %v644 = vrot.slane %v642, 4
      %v645 = vshll.u32 %v550, 16
      %v647 = vrot.slane %v645, 5
      %v648 = vor.u32 %v644, %v647
      %v649 = vrot.slane %v648, 4
      %v651 = vshll.u32 %v551, 16
      %v653 = vrot.slane %v651, 5
      %v654 = vsel %vm556, %v649, %v653
      %v656 = vshrl.u32 %v552, 16
      %v658 = vrot.slane %v656, 4
      %v659 = vshll.u32 %v552, 16
      %v661 = vrot.slane %v659, 5
      %v662 = vor.u32 %v658, %v661
      %v663 = vrot.slane %v662, 4
      %v665 = vshll.u32 %v553, 16
      %v667 = vrot.slane %v665, 5
      %v668 = vsel %vm556, %v663, %v667
      %669 = vrot.lane.b32.xlu0 %v570, 4
      %v670 = vpop.permute.xlu0 %669
      %671 = vrot.lane.b32.xlu0 %v584, 4
      %v672 = vpop.permute.xlu0 %671
      %673 = vrot.lane.b32.xlu0 %v598, 4
      %v674 = vpop.permute.xlu0 %673
      %675 = vrot.lane.b32.xlu0 %v612, 4
      %v676 = vpop.permute.xlu0 %675
      %677 = vrot.lane.b32.xlu0 %v626, 4
      %v678 = vpop.permute.xlu0 %677
      %679 = vrot.lane.b32.xlu0 %v640, 4
      %v680 = vpop.permute.xlu0 %679
      %681 = vrot.lane.b32.xlu0 %v654, 4
      %v682 = vpop.permute.xlu0 %681
      %683 = vrot.lane.b32.xlu0 %v668, 4
      %v684 = vpop.permute.xlu0 %683
      %vm693 = vcmask 60448
      %694 = vst.msk [vmem:[#allocation3] sm:$0xf] %vm693, %v670
      %695 = vst.msk [vmem:[#allocation3 + $0x4] sm:$0xf] %vm693, %v672
      %696 = vst.msk [vmem:[#allocation3 + $0x8] sm:$0xf] %vm693, %v674
      %697 = vst.msk [vmem:[#allocation3 + $0xc] sm:$0xf] %vm693, %v676
      %698 = vst.msk [vmem:[#allocation3 + $0x10] sm:$0xf] %vm693, %v678
      %699 = vst.msk [vmem:[#allocation3 + $0x14] sm:$0xf] %vm693, %v680
      %700 = vst.msk [vmem:[#allocation3 + $0x18] sm:$0xf] %vm693, %v682
      %701 = vst.msk [vmem:[#allocation3 + $0x1c] sm:$0xf] %vm693, %v684
      %v702 = vld [vmem:[#allocation2] sm:$0xe]
      %v703 = vld [vmem:[#allocation2 + $0x4] sm:$0x1]
      %v704 = vld [vmem:[#allocation2 + $0x8] sm:$0xe]
      %v705 = vld [vmem:[#allocation2 + $0xc] sm:$0x1]
      %v706 = vld [vmem:[#allocation2 + $0x10] sm:$0xe]
      %v707 = vld [vmem:[#allocation2 + $0x14] sm:$0x1]
      %v708 = vld [vmem:[#allocation2 + $0x18] sm:$0xe]
      %v709 = vld [vmem:[#allocation2 + $0x1c] sm:$0x1]
      %v710 = vld [vmem:[#allocation2 + $0x20] sm:$0xe]
      %v711 = vld [vmem:[#allocation2 + $0x24] sm:$0x1]
      %v712 = vld [vmem:[#allocation2 + $0x28] sm:$0xe]
      %v713 = vld [vmem:[#allocation2 + $0x2c] sm:$0x1]
      %v714 = vld [vmem:[#allocation2 + $0x30] sm:$0xe]
      %v715 = vld [vmem:[#allocation2 + $0x34] sm:$0x1]
      %v716 = vld [vmem:[#allocation2 + $0x38] sm:$0xe]
      %v717 = vld [vmem:[#allocation2 + $0x3c] sm:$0x1]
      %vm734 = vcmask 1042432
      %vm735 = vcmask 1046532
      %vm736 = vmor %vm734, %vm735
      %v737 = vrot.slane %v702, 5
      %v738 = vrot.slane %v737, 4
      %v739 = vrot.slane %v703, 5
      %v740 = vsel %vm736, %v738, %v739
      %v741 = vrot.slane %v704, 5
      %v742 = vrot.slane %v741, 4
      %v743 = vrot.slane %v705, 5
      %v744 = vsel %vm736, %v742, %v743
      %v745 = vrot.slane %v706, 5
      %v746 = vrot.slane %v745, 4
      %v747 = vrot.slane %v707, 5
      %v748 = vsel %vm736, %v746, %v747
      %v749 = vrot.slane %v708, 5
      %v750 = vrot.slane %v749, 4
      %v751 = vrot.slane %v709, 5
      %v752 = vsel %vm736, %v750, %v751
      %v753 = vrot.slane %v710, 5
      %v754 = vrot.slane %v753, 4
      %v755 = vrot.slane %v711, 5
      %v756 = vsel %vm736, %v754, %v755
      %v757 = vrot.slane %v712, 5
      %v758 = vrot.slane %v757, 4
      %v759 = vrot.slane %v713, 5
      %v760 = vsel %vm736, %v758, %v759
      %v761 = vrot.slane %v714, 5
      %v762 = vrot.slane %v761, 4
      %v763 = vrot.slane %v715, 5
      %v764 = vsel %vm736, %v762, %v763
      %v765 = vrot.slane %v716, 5
      %v766 = vrot.slane %v765, 4
      %v767 = vrot.slane %v717, 5
      %v768 = vsel %vm736, %v766, %v767
      %769 = vrot.lane.b32.xlu0 %v740, 8
      %v770 = vpop.permute.xlu0 %769
      %771 = vrot.lane.b32.xlu0 %v744, 8
      %v772 = vpop.permute.xlu0 %771
      %773 = vrot.lane.b32.xlu0 %v748, 8
      %v774 = vpop.permute.xlu0 %773
      %775 = vrot.lane.b32.xlu0 %v752, 8
      %v776 = vpop.permute.xlu0 %775
      %777 = vrot.lane.b32.xlu0 %v756, 8
      %v778 = vpop.permute.xlu0 %777
      %779 = vrot.lane.b32.xlu0 %v760, 8
      %v780 = vpop.permute.xlu0 %779
      %781 = vrot.lane.b32.xlu0 %v764, 8
      %v782 = vpop.permute.xlu0 %781
      %783 = vrot.lane.b32.xlu0 %v768, 8
      %v784 = vpop.permute.xlu0 %783
      %vm793 = vcmask 93248
      %794 = vst.msk [vmem:[#allocation3] sm:$0xf] %vm793, %v770
      %795 = vst.msk [vmem:[#allocation3 + $0x4] sm:$0xf] %vm793, %v772
      %796 = vst.msk [vmem:[#allocation3 + $0x8] sm:$0xf] %vm793, %v774
      %797 = vst.msk [vmem:[#allocation3 + $0xc] sm:$0xf] %vm793, %v776
      %798 = vst.msk [vmem:[#allocation3 + $0x10] sm:$0xf] %vm793, %v778
      %799 = vst.msk [vmem:[#allocation3 + $0x14] sm:$0xf] %vm793, %v780
      %800 = vst.msk [vmem:[#allocation3 + $0x18] sm:$0xf] %vm793, %v782
      %801 = vst.msk [vmem:[#allocation3 + $0x1c] sm:$0xf] %vm793, %v784
      %v802 = vld [vmem:[%s471] sm:$0xf]
      %v803 = vld [vmem:[%s471 + $0x8] sm:$0xf]
      %v804 = vld [vmem:[%s471 + $0x10] sm:$0xf]
      %v805 = vld [vmem:[%s471 + $0x18] sm:$0xf]
      %v806 = vld [vmem:[%s471 + $0x20] sm:$0xf]
      %v807 = vld [vmem:[%s471 + $0x28] sm:$0xf]
      %v808 = vld [vmem:[%s471 + $0x30] sm:$0xf]
      %v809 = vld [vmem:[%s471 + $0x38] sm:$0xf]
      %818 = vrot.lane.b32.xlu0 %v802, 12
      %v819 = vpop.permute.xlu0 %818
      %820 = vrot.lane.b32.xlu0 %v803, 12
      %v821 = vpop.permute.xlu0 %820
      %822 = vrot.lane.b32.xlu0 %v804, 12
      %v823 = vpop.permute.xlu0 %822
      %824 = vrot.lane.b32.xlu0 %v805, 12
      %v825 = vpop.permute.xlu0 %824
      %826 = vrot.lane.b32.xlu0 %v806, 12
      %v827 = vpop.permute.xlu0 %826
      %828 = vrot.lane.b32.xlu0 %v807, 12
      %v829 = vpop.permute.xlu0 %828
      %830 = vrot.lane.b32.xlu0 %v808, 12
      %v831 = vpop.permute.xlu0 %830
      %832 = vrot.lane.b32.xlu0 %v809, 12
      %v833 = vpop.permute.xlu0 %832
      %vm842 = vcmask 126048
      %843 = vst.msk [vmem:[#allocation3] sm:$0xf] %vm842, %v819
      %844 = vst.msk [vmem:[#allocation3 + $0x4] sm:$0xf] %vm842, %v821
      %845 = vst.msk [vmem:[#allocation3 + $0x8] sm:$0xf] %vm842, %v823
      %846 = vst.msk [vmem:[#allocation3 + $0xc] sm:$0xf] %vm842, %v825
      %847 = vst.msk [vmem:[#allocation3 + $0x10] sm:$0xf] %vm842, %v827
      %848 = vst.msk [vmem:[#allocation3 + $0x14] sm:$0xf] %vm842, %v829
      %849 = vst.msk [vmem:[#allocation3 + $0x18] sm:$0xf] %vm842, %v831
      %850 = vst.msk [vmem:[#allocation3 + $0x1c] sm:$0xf] %vm842, %v833
      %v851 = vld [vmem:[%s471] sm:$0xf]
      %v852 = vld [vmem:[%s471 + $0x4] sm:$0x1]
      %v853 = vld [vmem:[%s471 + $0x8] sm:$0xf]
      %v854 = vld [vmem:[%s471 + $0xc] sm:$0x1]
      %v855 = vld [vmem:[%s471 + $0x10] sm:$0xf]
      %v856 = vld [vmem:[%s471 + $0x14] sm:$0x1]
      %v857 = vld [vmem:[%s471 + $0x18] sm:$0xf]
      %v858 = vld [vmem:[%s471 + $0x1c] sm:$0x1]
      %v859 = vld [vmem:[%s471 + $0x20] sm:$0xf]
      %v860 = vld [vmem:[%s471 + $0x24] sm:$0x1]
      %v861 = vld [vmem:[%s471 + $0x28] sm:$0xf]
      %v862 = vld [vmem:[%s471 + $0x2c] sm:$0x1]
      %v863 = vld [vmem:[%s471 + $0x30] sm:$0xf]
      %v864 = vld [vmem:[%s471 + $0x34] sm:$0x1]
      %v865 = vld [vmem:[%s471 + $0x38] sm:$0xf]
      %v866 = vld [vmem:[%s471 + $0x3c] sm:$0x1]
      %v868 = vshrl.u32 %v851, 16
      %v870 = vrot.slane %v868, 4
      %v871 = vshll.u32 %v851, 16
      %v873 = vrot.slane %v871, 5
      %v874 = vor.u32 %v870, %v873
      %v875 = vrot.slane %v874, 4
      %v877 = vshll.u32 %v852, 16
      %v879 = vrot.slane %v877, 5
      %v880 = vsel %vm556, %v875, %v879
      %v882 = vshrl.u32 %v853, 16
      %v884 = vrot.slane %v882, 4
      %v885 = vshll.u32 %v853, 16
      %v887 = vrot.slane %v885, 5
      %v888 = vor.u32 %v884, %v887
      %v889 = vrot.slane %v888, 4
      %v891 = vshll.u32 %v854, 16
      %v893 = vrot.slane %v891, 5
      %v894 = vsel %vm556, %v889, %v893
      %v896 = vshrl.u32 %v855, 16
      %v898 = vrot.slane %v896, 4
      %v899 = vshll.u32 %v855, 16
      %v901 = vrot.slane %v899, 5
      %v902 = vor.u32 %v898, %v901
      %v903 = vrot.slane %v902, 4
      %v905 = vshll.u32 %v856, 16
      %v907 = vrot.slane %v905, 5
      %v908 = vsel %vm556, %v903, %v907
      %v910 = vshrl.u32 %v857, 16
      %v912 = vrot.slane %v910, 4
      %v913 = vshll.u32 %v857, 16
      %v915 = vrot.slane %v913, 5
      %v916 = vor.u32 %v912, %v915
      %v917 = vrot.slane %v916, 4
      %v919 = vshll.u32 %v858, 16
      %v921 = vrot.slane %v919, 5
      %v922 = vsel %vm556, %v917, %v921
      %v924 = vshrl.u32 %v859, 16
      %v926 = vrot.slane %v924, 4
      %v927 = vshll.u32 %v859, 16
      %v929 = vrot.slane %v927, 5
      %v930 = vor.u32 %v926, %v929
      %v931 = vrot.slane %v930, 4
      %v933 = vshll.u32 %v860, 16
      %v935 = vrot.slane %v933, 5
      %v936 = vsel %vm556, %v931, %v935
      %v938 = vshrl.u32 %v861, 16
      %v940 = vrot.slane %v938, 4
      %v941 = vshll.u32 %v861, 16
      %v943 = vrot.slane %v941, 5
      %v944 = vor.u32 %v940, %v943
      %v945 = vrot.slane %v944, 4
      %v947 = vshll.u32 %v862, 16
      %v949 = vrot.slane %v947, 5
      %v950 = vsel %vm556, %v945, %v949
      %v952 = vshrl.u32 %v863, 16
      %v954 = vrot.slane %v952, 4
      %v955 = vshll.u32 %v863, 16
      %v957 = vrot.slane %v955, 5
      %v958 = vor.u32 %v954, %v957
      %v959 = vrot.slane %v958, 4
      %v961 = vshll.u32 %v864, 16
      %v963 = vrot.slane %v961, 5
      %v964 = vsel %vm556, %v959, %v963
      %v966 = vshrl.u32 %v865, 16
      %v968 = vrot.slane %v966, 4
      %v969 = vshll.u32 %v865, 16
      %v971 = vrot.slane %v969, 5
      %v972 = vor.u32 %v968, %v971
      %v973 = vrot.slane %v972, 4
      %v975 = vshll.u32 %v866, 16
      %v977 = vrot.slane %v975, 5
      %v978 = vsel %vm556, %v973, %v977
      %979 = vrot.lane.b32.xlu0 %v880, 16
      %v980 = vpop.permute.xlu0 %979
      %981 = vrot.lane.b32.xlu0 %v894, 16
      %v982 = vpop.permute.xlu0 %981
      %983 = vrot.lane.b32.xlu0 %v908, 16
      %v984 = vpop.permute.xlu0 %983
      %985 = vrot.lane.b32.xlu0 %v922, 16
      %v986 = vpop.permute.xlu0 %985
      %987 = vrot.lane.b32.xlu0 %v936, 16
      %v988 = vpop.permute.xlu0 %987
      %989 = vrot.lane.b32.xlu0 %v950, 16
      %v990 = vpop.permute.xlu0 %989
      %991 = vrot.lane.b32.xlu0 %v964, 16
      %v992 = vpop.permute.xlu0 %991
      %993 = vrot.lane.b32.xlu0 %v978, 16
      %v994 = vpop.permute.xlu0 %993
      %vm1003 = vcmask 158848
      %1004 = vst.msk [vmem:[#allocation3] sm:$0xf] %vm1003, %v980
      %1005 = vst.msk [vmem:[#allocation3 + $0x4] sm:$0xf] %vm1003, %v982
      %1006 = vst.msk [vmem:[#allocation3 + $0x8] sm:$0xf] %vm1003, %v984
      %1007 = vst.msk [vmem:[#allocation3 + $0xc] sm:$0xf] %vm1003, %v986
      %1008 = vst.msk [vmem:[#allocation3 + $0x10] sm:$0xf] %vm1003, %v988
      %1009 = vst.msk [vmem:[#allocation3 + $0x14] sm:$0xf] %vm1003, %v990
      %1010 = vst.msk [vmem:[#allocation3 + $0x18] sm:$0xf] %vm1003, %v992
      %1011 = vst.msk [vmem:[#allocation3 + $0x1c] sm:$0xf] %vm1003, %v994
      %v1012 = vld [vmem:[%s471] sm:$0xe]
      %v1013 = vld [vmem:[%s471 + $0x4] sm:$0x1]
      %v1014 = vld [vmem:[%s471 + $0x8] sm:$0xe]
      %v1015 = vld [vmem:[%s471 + $0xc] sm:$0x1]
      %v1016 = vld [vmem:[%s471 + $0x10] sm:$0xe]
      %v1017 = vld [vmem:[%s471 + $0x14] sm:$0x1]
      %v1018 = vld [vmem:[%s471 + $0x18] sm:$0xe]
      %v1019 = vld [vmem:[%s471 + $0x1c] sm:$0x1]
      %v1020 = vld [vmem:[%s471 + $0x20] sm:$0xe]
      %v1021 = vld [vmem:[%s471 + $0x24] sm:$0x1]
      %v1022 = vld [vmem:[%s471 + $0x28] sm:$0xe]
      %v1023 = vld [vmem:[%s471 + $0x2c] sm:$0x1]
      %v1024 = vld [vmem:[%s471 + $0x30] sm:$0xe]
      %v1025 = vld [vmem:[%s471 + $0x34] sm:$0x1]
      %v1026 = vld [vmem:[%s471 + $0x38] sm:$0xe]
      %v1027 = vld [vmem:[%s471 + $0x3c] sm:$0x1]
      %v1044 = vrot.slane %v1012, 5
      %v1045 = vrot.slane %v1044, 4
      %v1046 = vrot.slane %v1013, 5
      %v1047 = vsel %vm736, %v1045, %v1046
      %v1048 = vrot.slane %v1014, 5
      %v1049 = vrot.slane %v1048, 4
      %v1050 = vrot.slane %v1015, 5
      %v1051 = vsel %vm736, %v1049, %v1050
      %v1052 = vrot.slane %v1016, 5
      %v1053 = vrot.slane %v1052, 4
      %v1054 = vrot.slane %v1017, 5
      %v1055 = vsel %vm736, %v1053, %v1054
      %v1056 = vrot.slane %v1018, 5
      %v1057 = vrot.slane %v1056, 4
      %v1058 = vrot.slane %v1019, 5
      %v1059 = vsel %vm736, %v1057, %v1058
      %v1060 = vrot.slane %v1020, 5
      %v1061 = vrot.slane %v1060, 4
      %v1062 = vrot.slane %v1021, 5
      %v1063 = vsel %vm736, %v1061, %v1062
      %v1064 = vrot.slane %v1022, 5
      %v1065 = vrot.slane %v1064, 4
      %v1066 = vrot.slane %v1023, 5
      %v1067 = vsel %vm736, %v1065, %v1066
      %v1068 = vrot.slane %v1024, 5
      %v1069 = vrot.slane %v1068, 4
      %v1070 = vrot.slane %v1025, 5
      %v1071 = vsel %vm736, %v1069, %v1070
      %v1072 = vrot.slane %v1026, 5
      %v1073 = vrot.slane %v1072, 4
      %v1074 = vrot.slane %v1027, 5
      %v1075 = vsel %vm736, %v1073, %v1074
      %1076 = vrot.lane.b32.xlu0 %v1047, 20
      %v1077 = vpop.permute.xlu0 %1076
      %1078 = vrot.lane.b32.xlu0 %v1051, 20
      %v1079 = vpop.permute.xlu0 %1078
      %1080 = vrot.lane.b32.xlu0 %v1055, 20
      %v1081 = vpop.permute.xlu0 %1080
      %1082 = vrot.lane.b32.xlu0 %v1059, 20
      %v1083 = vpop.permute.xlu0 %1082
      %1084 = vrot.lane.b32.xlu0 %v1063, 20
      %v1085 = vpop.permute.xlu0 %1084
      %1086 = vrot.lane.b32.xlu0 %v1067, 20
      %v1087 = vpop.permute.xlu0 %1086
      %1088 = vrot.lane.b32.xlu0 %v1071, 20
      %v1089 = vpop.permute.xlu0 %1088
      %1090 = vrot.lane.b32.xlu0 %v1075, 20
      %v1091 = vpop.permute.xlu0 %1090
      %vm1100 = vcmask 191648
      %1101 = vst.msk [vmem:[#allocation3] sm:$0xf] %vm1100, %v1077
      %1102 = vst.msk [vmem:[#allocation3 + $0x4] sm:$0xf] %vm1100, %v1079
      %1103 = vst.msk [vmem:[#allocation3 + $0x8] sm:$0xf] %vm1100, %v1081
      %1104 = vst.msk [vmem:[#allocation3 + $0xc] sm:$0xf] %vm1100, %v1083
      %1105 = vst.msk [vmem:[#allocation3 + $0x10] sm:$0xf] %vm1100, %v1085
      %1106 = vst.msk [vmem:[#allocation3 + $0x14] sm:$0xf] %vm1100, %v1087
      %1107 = vst.msk [vmem:[#allocation3 + $0x18] sm:$0xf] %vm1100, %v1089
      %1108 = vst.msk [vmem:[#allocation3 + $0x1c] sm:$0xf] %vm1100, %v1091
      %s1109 = scalar_lea.vmem [#allocation2], 16
      %v1110 = vld [vmem:[%s1109] sm:$0xf]
      %v1111 = vld [vmem:[%s1109 + $0x8] sm:$0xf]
      %v1112 = vld [vmem:[%s1109 + $0x10] sm:$0xf]
      %v1113 = vld [vmem:[%s1109 + $0x18] sm:$0xf]
      %v1114 = vld [vmem:[%s1109 + $0x20] sm:$0xf]
      %v1115 = vld [vmem:[%s1109 + $0x28] sm:$0xf]
      %v1116 = vld [vmem:[%s1109 + $0x30] sm:$0xf]
      %v1117 = vld [vmem:[%s1109 + $0x38] sm:$0xf]
      %1126 = vrot.lane.b32.xlu0 %v1110, 24
      %v1127 = vpop.permute.xlu0 %1126
      %1128 = vrot.lane.b32.xlu0 %v1111, 24
      %v1129 = vpop.permute.xlu0 %1128
      %1130 = vrot.lane.b32.xlu0 %v1112, 24
      %v1131 = vpop.permute.xlu0 %1130
      %1132 = vrot.lane.b32.xlu0 %v1113, 24
      %v1133 = vpop.permute.xlu0 %1132
      %1134 = vrot.lane.b32.xlu0 %v1114, 24
      %v1135 = vpop.permute.xlu0 %1134
      %1136 = vrot.lane.b32.xlu0 %v1115, 24
      %v1137 = vpop.permute.xlu0 %1136
      %1138 = vrot.lane.b32.xlu0 %v1116, 24
      %v1139 = vpop.permute.xlu0 %1138
      %1140 = vrot.lane.b32.xlu0 %v1117, 24
      %v1141 = vpop.permute.xlu0 %1140
      %vm1150 = vcmask 224448
      %1151 = vst.msk [vmem:[#allocation3] sm:$0xf] %vm1150, %v1127
      %1152 = vst.msk [vmem:[#allocation3 + $0x4] sm:$0xf] %vm1150, %v1129
      %1153 = vst.msk [vmem:[#allocation3 + $0x8] sm:$0xf] %vm1150, %v1131
      %1154 = vst.msk [vmem:[#allocation3 + $0xc] sm:$0xf] %vm1150, %v1133
      %1155 = vst.msk [vmem:[#allocation3 + $0x10] sm:$0xf] %vm1150, %v1135
      %1156 = vst.msk [vmem:[#allocation3 + $0x14] sm:$0xf] %vm1150, %v1137
      %1157 = vst.msk [vmem:[#allocation3 + $0x18] sm:$0xf] %vm1150, %v1139
      %1158 = vst.msk [vmem:[#allocation3 + $0x1c] sm:$0xf] %vm1150, %v1141
      %v1159 = vld [vmem:[%s1109] sm:$0xf]
      %v1160 = vld [vmem:[%s1109 + $0x4] sm:$0x1]
      %v1161 = vld [vmem:[%s1109 + $0x8] sm:$0xf]
      %v1162 = vld [vmem:[%s1109 + $0xc] sm:$0x1]
      %v1163 = vld [vmem:[%s1109 + $0x10] sm:$0xf]
      %v1164 = vld [vmem:[%s1109 + $0x14] sm:$0x1]
      %v1165 = vld [vmem:[%s1109 + $0x18] sm:$0xf]
      %v1166 = vld [vmem:[%s1109 + $0x1c] sm:$0x1]
      %v1167 = vld [vmem:[%s1109 + $0x20] sm:$0xf]
      %v1168 = vld [vmem:[%s1109 + $0x24] sm:$0x1]
      %v1169 = vld [vmem:[%s1109 + $0x28] sm:$0xf]
      %v1170 = vld [vmem:[%s1109 + $0x2c] sm:$0x1]
      %v1171 = vld [vmem:[%s1109 + $0x30] sm:$0xf]
      %v1172 = vld [vmem:[%s1109 + $0x34] sm:$0x1]
      %v1173 = vld [vmem:[%s1109 + $0x38] sm:$0xf]
      %v1174 = vld [vmem:[%s1109 + $0x3c] sm:$0x1]
      %v1176 = vshrl.u32 %v1159, 16
      %v1178 = vrot.slane %v1176, 4
      %v1179 = vshll.u32 %v1159, 16
      %v1181 = vrot.slane %v1179, 5
      %v1182 = vor.u32 %v1178, %v1181
      %v1183 = vrot.slane %v1182, 4
      %v1185 = vshll.u32 %v1160, 16
      %v1187 = vrot.slane %v1185, 5
      %v1188 = vsel %vm556, %v1183, %v1187
      %v1190 = vshrl.u32 %v1161, 16
      %v1192 = vrot.slane %v1190, 4
      %v1193 = vshll.u32 %v1161, 16
      %v1195 = vrot.slane %v1193, 5
      %v1196 = vor.u32 %v1192, %v1195
      %v1197 = vrot.slane %v1196, 4
      %v1199 = vshll.u32 %v1162, 16
      %v1201 = vrot.slane %v1199, 5
      %v1202 = vsel %vm556, %v1197, %v1201
      %v1204 = vshrl.u32 %v1163, 16
      %v1206 = vrot.slane %v1204, 4
      %v1207 = vshll.u32 %v1163, 16
      %v1209 = vrot.slane %v1207, 5
      %v1210 = vor.u32 %v1206, %v1209
      %v1211 = vrot.slane %v1210, 4
      %v1213 = vshll.u32 %v1164, 16
      %v1215 = vrot.slane %v1213, 5
      %v1216 = vsel %vm556, %v1211, %v1215
      %v1218 = vshrl.u32 %v1165, 16
      %v1220 = vrot.slane %v1218, 4
      %v1221 = vshll.u32 %v1165, 16
      %v1223 = vrot.slane %v1221, 5
      %v1224 = vor.u32 %v1220, %v1223
      %v1225 = vrot.slane %v1224, 4
      %v1227 = vshll.u32 %v1166, 16
      %v1229 = vrot.slane %v1227, 5
      %v1230 = vsel %vm556, %v1225, %v1229
      %v1232 = vshrl.u32 %v1167, 16
      %v1234 = vrot.slane %v1232, 4
      %v1235 = vshll.u32 %v1167, 16
      %v1237 = vrot.slane %v1235, 5
      %v1238 = vor.u32 %v1234, %v1237
      %v1239 = vrot.slane %v1238, 4
      %v1241 = vshll.u32 %v1168, 16
      %v1243 = vrot.slane %v1241, 5
      %v1244 = vsel %vm556, %v1239, %v1243
      %v1246 = vshrl.u32 %v1169, 16
      %v1248 = vrot.slane %v1246, 4
      %v1249 = vshll.u32 %v1169, 16
      %v1251 = vrot.slane %v1249, 5
      %v1252 = vor.u32 %v1248, %v1251
      %v1253 = vrot.slane %v1252, 4
      %v1255 = vshll.u32 %v1170, 16
      %v1257 = vrot.slane %v1255, 5
      %v1258 = vsel %vm556, %v1253, %v1257
      %v1260 = vshrl.u32 %v1171, 16
      %v1262 = vrot.slane %v1260, 4
      %v1263 = vshll.u32 %v1171, 16
      %v1265 = vrot.slane %v1263, 5
      %v1266 = vor.u32 %v1262, %v1265
      %v1267 = vrot.slane %v1266, 4
      %v1269 = vshll.u32 %v1172, 16
      %v1271 = vrot.slane %v1269, 5
      %v1272 = vsel %vm556, %v1267, %v1271
      %v1274 = vshrl.u32 %v1173, 16
      %v1276 = vrot.slane %v1274, 4
      %v1277 = vshll.u32 %v1173, 16
      %v1279 = vrot.slane %v1277, 5
      %v1280 = vor.u32 %v1276, %v1279
      %v1281 = vrot.slane %v1280, 4
      %v1283 = vshll.u32 %v1174, 16
      %v1285 = vrot.slane %v1283, 5
      %v1286 = vsel %vm556, %v1281, %v1285
      %1287 = vrot.lane.b32.xlu0 %v1188, 28
      %v1288 = vpop.permute.xlu0 %1287
      %1289 = vrot.lane.b32.xlu0 %v1202, 28
      %v1290 = vpop.permute.xlu0 %1289
      %1291 = vrot.lane.b32.xlu0 %v1216, 28
      %v1292 = vpop.permute.xlu0 %1291
      %1293 = vrot.lane.b32.xlu0 %v1230, 28
      %v1294 = vpop.permute.xlu0 %1293
      %1295 = vrot.lane.b32.xlu0 %v1244, 28
      %v1296 = vpop.permute.xlu0 %1295
      %1297 = vrot.lane.b32.xlu0 %v1258, 28
      %v1298 = vpop.permute.xlu0 %1297
      %1299 = vrot.lane.b32.xlu0 %v1272, 28
      %v1300 = vpop.permute.xlu0 %1299
      %1301 = vrot.lane.b32.xlu0 %v1286, 28
      %v1302 = vpop.permute.xlu0 %1301
      %vm1311 = vcmask 257248
      %1312 = vst.msk [vmem:[#allocation3] sm:$0xf] %vm1311, %v1288
      %1313 = vst.msk [vmem:[#allocation3 + $0x4] sm:$0xf] %vm1311, %v1290
      %1314 = vst.msk [vmem:[#allocation3 + $0x8] sm:$0xf] %vm1311, %v1292
      %1315 = vst.msk [vmem:[#allocation3 + $0xc] sm:$0xf] %vm1311, %v1294
      %1316 = vst.msk [vmem:[#allocation3 + $0x10] sm:$0xf] %vm1311, %v1296
      %1317 = vst.msk [vmem:[#allocation3 + $0x14] sm:$0xf] %vm1311, %v1298
      %1318 = vst.msk [vmem:[#allocation3 + $0x18] sm:$0xf] %vm1311, %v1300
      %1319 = vst.msk [vmem:[#allocation3 + $0x1c] sm:$0xf] %vm1311, %v1302
      %v1320 = vld [vmem:[%s1109] sm:$0xe]
      %v1321 = vld [vmem:[%s1109 + $0x4] sm:$0x1]
      %v1322 = vld [vmem:[%s1109 + $0x8] sm:$0xe]
      %v1323 = vld [vmem:[%s1109 + $0xc] sm:$0x1]
      %v1324 = vld [vmem:[%s1109 + $0x10] sm:$0xe]
      %v1325 = vld [vmem:[%s1109 + $0x14] sm:$0x1]
      %v1326 = vld [vmem:[%s1109 + $0x18] sm:$0xe]
      %v1327 = vld [vmem:[%s1109 + $0x1c] sm:$0x1]
      %v1328 = vld [vmem:[%s1109 + $0x20] sm:$0xe]
      %v1329 = vld [vmem:[%s1109 + $0x24] sm:$0x1]
      %v1330 = vld [vmem:[%s1109 + $0x28] sm:$0xe]
      %v1331 = vld [vmem:[%s1109 + $0x2c] sm:$0x1]
      %v1332 = vld [vmem:[%s1109 + $0x30] sm:$0xe]
      %v1333 = vld [vmem:[%s1109 + $0x34] sm:$0x1]
      %v1334 = vld [vmem:[%s1109 + $0x38] sm:$0xe]
      %v1335 = vld [vmem:[%s1109 + $0x3c] sm:$0x1]
      %v1352 = vrot.slane %v1320, 5
      %v1353 = vrot.slane %v1352, 4
      %v1354 = vrot.slane %v1321, 5
      %v1355 = vsel %vm736, %v1353, %v1354
      %v1356 = vrot.slane %v1322, 5
      %v1357 = vrot.slane %v1356, 4
      %v1358 = vrot.slane %v1323, 5
      %v1359 = vsel %vm736, %v1357, %v1358
      %v1360 = vrot.slane %v1324, 5
      %v1361 = vrot.slane %v1360, 4
      %v1362 = vrot.slane %v1325, 5
      %v1363 = vsel %vm736, %v1361, %v1362
      %v1364 = vrot.slane %v1326, 5
      %v1365 = vrot.slane %v1364, 4
      %v1366 = vrot.slane %v1327, 5
      %v1367 = vsel %vm736, %v1365, %v1366
      %v1368 = vrot.slane %v1328, 5
      %v1369 = vrot.slane %v1368, 4
      %v1370 = vrot.slane %v1329, 5
      %v1371 = vsel %vm736, %v1369, %v1370
      %v1372 = vrot.slane %v1330, 5
      %v1373 = vrot.slane %v1372, 4
      %v1374 = vrot.slane %v1331, 5
      %v1375 = vsel %vm736, %v1373, %v1374
      %v1376 = vrot.slane %v1332, 5
      %v1377 = vrot.slane %v1376, 4
      %v1378 = vrot.slane %v1333, 5
      %v1379 = vsel %vm736, %v1377, %v1378
      %v1380 = vrot.slane %v1334, 5
      %v1381 = vrot.slane %v1380, 4
      %v1382 = vrot.slane %v1335, 5
      %v1383 = vsel %vm736, %v1381, %v1382
      %1384 = vrot.lane.b32.xlu0 %v1355, 32
      %v1385 = vpop.permute.xlu0 %1384
      %1386 = vrot.lane.b32.xlu0 %v1359, 32
      %v1387 = vpop.permute.xlu0 %1386
      %1388 = vrot.lane.b32.xlu0 %v1363, 32
      %v1389 = vpop.permute.xlu0 %1388
      %1390 = vrot.lane.b32.xlu0 %v1367, 32
      %v1391 = vpop.permute.xlu0 %1390
      %1392 = vrot.lane.b32.xlu0 %v1371, 32
      %v1393 = vpop.permute.xlu0 %1392
      %1394 = vrot.lane.b32.xlu0 %v1375, 32
      %v1395 = vpop.permute.xlu0 %1394
      %1396 = vrot.lane.b32.xlu0 %v1379, 32
      %v1397 = vpop.permute.xlu0 %1396
      %1398 = vrot.lane.b32.xlu0 %v1383, 32
      %v1399 = vpop.permute.xlu0 %1398
      %vm1408 = vcmask 290048
      %1409 = vst.msk [vmem:[#allocation3] sm:$0xf] %vm1408, %v1385
      %1410 = vst.msk [vmem:[#allocation3 + $0x4] sm:$0xf] %vm1408, %v1387
      %1411 = vst.msk [vmem:[#allocation3 + $0x8] sm:$0xf] %vm1408, %v1389
      %1412 = vst.msk [vmem:[#allocation3 + $0xc] sm:$0xf] %vm1408, %v1391
      %1413 = vst.msk [vmem:[#allocation3 + $0x10] sm:$0xf] %vm1408, %v1393
      %1414 = vst.msk [vmem:[#allocation3 + $0x14] sm:$0xf] %vm1408, %v1395
      %1415 = vst.msk [vmem:[#allocation3 + $0x18] sm:$0xf] %vm1408, %v1397
      %1416 = vst.msk [vmem:[#allocation3 + $0x1c] sm:$0xf] %vm1408, %v1399
      %v1417 = vld [vmem:[#allocation3] sm:$0xf]
      %v1418 = vld [vmem:[#allocation3 + $0x4] sm:$0xf]
      %v1419 = vld [vmem:[#allocation3 + $0x8] sm:$0xf]
      %v1420 = vld [vmem:[#allocation3 + $0xc] sm:$0xf]
      %v1421 = vld [vmem:[#allocation3 + $0x10] sm:$0xf]
      %v1422 = vld [vmem:[#allocation3 + $0x14] sm:$0xf]
      %v1423 = vld [vmem:[#allocation3 + $0x18] sm:$0xf]
      %v1424 = vld [vmem:[#allocation3 + $0x1c] sm:$0xf]
      %v1425 = vld [vmem:[%s1] sm:$0xf]
      %v1426 = vld [vmem:[%s1 + $0x4] sm:$0xf]
      %v1427 = vld [vmem:[%s1 + $0x8] sm:$0xf]
      %v1428 = vld [vmem:[%s1 + $0xc] sm:$0xf]
      %v1429 = vld [vmem:[%s1 + $0x10] sm:$0x3]
      %v1438 = vunpack.c.l.b16 %v1417
      %v1439 = vunpack.c.l.b16 %v1418
      %v1440 = vunpack.c.l.b16 %v1419
      %v1441 = vunpack.c.l.b16 %v1420
      %v1442 = vunpack.c.l.b16 %v1421
      %v1443 = vunpack.c.l.b16 %v1422
      %v1444 = vunpack.c.l.b16 %v1423
      %v1445 = vunpack.c.l.b16 %v1424
      %v1446 = vpack.c.b16 %v1439, %v1438
      %v1447 = vpack.c.b16 %v1441, %v1440
      %v1448 = vpack.c.b16 %v1443, %v1442
      %v1449 = vpack.c.b16 %v1445, %v1444
      %v1455 = vunpack.c.l.b16 %v1425
      %v1456 = vunpack.c.l.b16 %v1426
      %v1457 = vunpack.c.l.b16 %v1427
      %v1458 = vunpack.c.l.b16 %v1428
      %v1459 = vunpack.c.l.b16 %v1429
      %v1460 = vpack.c.b16 %v1456, %v1455
      %v1461 = vpack.c.b16 %v1458, %v1457
      %v1462 = vpack.c.b16 %v1459, %v1459
      %vm1465 = vcmask 293888
      %v1467 = vsel %vm1465, %v1446, 0
      %v1470 = vsel %vm1465, %v1447, 0
      %v1473 = vsel %vm1465, %v1448, 0
      %v1476 = vsel %vm1465, %v1449, 0
      %vm1478 = vcmask 1041408
      %v1480 = vsel %vm1478, %v1462, 0
      %1482 = vmatprep.subr.bf16.mxu0 0
      %1483 = vmatpush1.bf16.msra.mxu0 %v1460
      %1484 = vmatprep.subr.bf16.mxu0 0
      %1485 = vmatpush1.bf16.msra.mxu0 %v1461
      %1486 = vmatprep.subr.bf16.mxu0 0
      %1487 = vmatpush1.bf16.msra.mxu0 %v1480
      %1488 = vmatprep.subr.bf16.mxu0 0
      %1489 = vmatpush1.bf16.msra.mxu0 0
      %1490 = vmatprep.subr.bf16.mxu0 0
      %1491 = vmatpush1.bf16.msra.mxu0 0
      %1492 = vmatprep.subr.bf16.mxu0 0
      %1493 = vmatpush1.bf16.msra.mxu0 0
      %1494 = vmatprep.subr.bf16.mxu0 0
      %1495 = vmatpush1.bf16.msra.mxu0 0
      %1496 = vmatprep.subr.bf16.mxu0 0
      %1497 = vmatpush1.bf16.msra.mxu0 0
      %1498 = vmatprep.subr.bf16.mxu0 0
      %1499 = vmatpush1.bf16.msra.mxu0 0
      %1500 = vmatprep.subr.bf16.mxu0 0
      %1501 = vmatpush1.bf16.msra.mxu0 0
      %1502 = vmatprep.subr.bf16.mxu0 0
      %1503 = vmatpush1.bf16.msra.mxu0 0
      %1504 = vmatprep.subr.bf16.mxu0 0
      %1505 = vmatpush1.bf16.msra.mxu0 0
      %1506 = vmatprep.subr.bf16.mxu0 0
      %1507 = vmatpush1.bf16.msra.mxu0 0
      %1508 = vmatprep.subr.bf16.mxu0 0
      %1509 = vmatpush1.bf16.msra.mxu0 0
      %1510 = vmatprep.subr.bf16.mxu0 0
      %1511 = vmatpush1.bf16.msra.mxu0 0
      %1512 = vmatprep.subr.bf16.mxu0 0
      %1513 = vmatpush1.bf16.msra.mxu0 0
      %1514 = vmatprep.mubr.bf16.mxu0 0
      %1515 = vmatmul.mubr.bf16.gmra.mrb[0].mxu0 %v1467
      %v1516 = vpop.f32.mrb[0].mxu0
      %v1517 = vadd.f32 0.0, %v1516
      %v1518 = vpop.f32.mrb[0].mxu0
      %v1519 = vpop.f32.mrb[0].mxu0
      %v1520 = vadd.f32 0.0, %v1519
      %v1521 = vpop.f32.mrb[0].mxu0
      %1522 = vmatprep.mubr.bf16.mxu0 0
      %1523 = vmatmul.mubr.bf16.gmra.mrb[0].mxu0 %v1470
      %v1524 = vpop.f32.mrb[0].mxu0
      %v1525 = vadd.f32 0.0, %v1524
      %v1526 = vpop.f32.mrb[0].mxu0
      %v1527 = vpop.f32.mrb[0].mxu0
      %v1528 = vadd.f32 0.0, %v1527
      %v1529 = vpop.f32.mrb[0].mxu0
      %1530 = vmatprep.mubr.bf16.mxu0 0
      %1531 = vmatmul.mubr.bf16.gmra.mrb[0].mxu0 %v1473
      %v1532 = vpop.f32.mrb[0].mxu0
      %v1533 = vadd.f32 0.0, %v1532
      %v1534 = vpop.f32.mrb[0].mxu0
      %v1535 = vpop.f32.mrb[0].mxu0
      %v1536 = vadd.f32 0.0, %v1535
      %v1537 = vpop.f32.mrb[0].mxu0
      %1538 = vmatprep.mubr.bf16.mxu0 0
      %1539 = vmatmul.mubr.bf16.gmra.mrb[0].mxu0 %v1476
      %v1540 = vpop.f32.mrb[0].mxu0
      %v1541 = vadd.f32 0.0, %v1540
      %v1542 = vpop.f32.mrb[0].mxu0
      %v1543 = vpop.f32.mrb[0].mxu0
      %v1544 = vadd.f32 0.0, %v1543
      %v1545 = vpop.f32.mrb[0].mxu0
      %1546 = vdwg.mxu0
      %1547 = vst [vmem:[%s177] sm:$0xff] %v1517
      %1548 = vst [vmem:[%s177 + $0x8] sm:$0xff] %v1520
      %1549 = vst [vmem:[%s177 + $0x10] sm:$0xff] %v1525
      %1550 = vst [vmem:[%s177 + $0x18] sm:$0xff] %v1528
      %1551 = vst [vmem:[%s177 + $0x20] sm:$0xff] %v1533
      %1552 = vst [vmem:[%s177 + $0x28] sm:$0xff] %v1536
      %1553 = vst [vmem:[%s177 + $0x30] sm:$0xff] %v1541
      %1554 = vst [vmem:[%s177 + $0x38] sm:$0xff] %v1544
      %v1555 = vadd.f32 %v1517, %v1520
      %v1556 = vadd.f32 %v1555, %v1525
      %v1557 = vadd.f32 %v1556, %v1528
      %v1558 = vadd.f32 %v1557, %v1533
      %v1559 = vadd.f32 %v1558, %v1536
      %v1560 = vadd.f32 %v1559, %v1541
      %v1561 = vadd.f32 %v1560, %v1544
      %v1562 = vrot.slane %v1561, 4
      %v1563 = vadd.f32 %v1561, %v1562
      %v1564 = vrot.slane %v1563, 2
      %v1565 = vadd.f32 %v1563, %v1564
      %v1566 = vrot.slane %v1565, 1
      %v1567 = vadd.f32 %v1565, %v1566
      %1568 = vst [vmem:[%s181] sm:$0x1] %v1567
      %v1569 = vmul.f32 %v1517, %v1517
      %v1570 = vmul.f32 %v1520, %v1520
      %v1571 = vmul.f32 %v1525, %v1525
      %v1572 = vmul.f32 %v1528, %v1528
      %v1573 = vmul.f32 %v1533, %v1533
      %v1574 = vmul.f32 %v1536, %v1536
      %v1575 = vmul.f32 %v1541, %v1541
      %v1576 = vmul.f32 %v1544, %v1544
      %v1577 = vadd.f32 %v1569, %v1570
      %v1578 = vadd.f32 %v1577, %v1571
      %v1579 = vadd.f32 %v1578, %v1572
      %v1580 = vadd.f32 %v1579, %v1573
      %v1581 = vadd.f32 %v1580, %v1574
      %v1582 = vadd.f32 %v1581, %v1575
      %v1583 = vadd.f32 %v1582, %v1576
      %v1584 = vrot.slane %v1583, 4
      %v1585 = vadd.f32 %v1583, %v1584
      %v1586 = vrot.slane %v1585, 2
      %v1587 = vadd.f32 %v1585, %v1586
      %v1588 = vrot.slane %v1587, 1
      %v1589 = vadd.f32 %v1587, %v1588
      %1590 = vst [vmem:[%s181 + $0x1] sm:$0x1] %v1589
      %p1591 = scmp.lt.s32.totalorder %s15, 1
      %s1592 = scalar_select %p1591, %s15, 1
      %s1593 = smul.addr %s1592, 8
      %s1594 = smul.addr %s1593, 8
      %s1595 = scalar_lea.vmem %s2, %s1594
      %p1596 = scmp.lt.s32.totalorder %s15, 1
      %s1597 = scalar_select %p1596, %s15, 1
      %s1598 = smul.addr %s1597, 2
      %s1599 = scalar_lea.vmem %s3, %s1598
      // Predicated region
      $region29: #{down_forward.2} parent=27 // pred_check
        %p1600 = pneg %p80
      $region30: #{down_forward.2} parent=27 // pred_check_branch
        %1602 = sbr.rel (%p1600) target = $region32
      $region31: #{down_forward.2} parent=27 // pred_region
        _
      $region32: #{down_forward.2} parent=27 // pred_fallthru
        _
      // Predicated region
      $region33: #{down_forward.2} parent=27 // pred_check
        %p1603 = pneg %p106
      $region34: #{down_forward.2} parent=27 // pred_check_branch
        %1605 = sbr.rel (%p1603) target = $region36
      $region35: #{down_forward.2} parent=27 // pred_region
        _
      $region36: #{down_forward.2} parent=27 // pred_fallthru
        _
    $region28: #{down_forward.2} parent=5 // pred_fallthru
      _
    %p1606 = scmp.le.s32.totalorder 2, %s10
    // Predicated region
    $region37: #{down_forward.2} parent=5 // pred_check
      %p1607 = pneg %p1606
    $region38: #{down_forward.2} parent=5 // pred_check_branch
      %1609 = sbr.rel (%p1607) target = $region40
    $region39: #{down_forward.2} parent=5 // pred_region
      %s1610 = ssub.s32 %s10, 2
      // Predicated region
      $region41: #{down_forward.2} parent=39 // pred_check
        %p1611 = pneg %p86
      $region42: #{down_forward.2} parent=39 // pred_check_branch
        %1613 = sbr.rel (%p1611) target = $region44
      $region43: #{down_forward.2} parent=39 // pred_region
        %p1614 = scmp.lt.s32.totalorder %s16, 1
        %s1615 = scalar_select %p1614, %s16, 1
        %s1616 = smul.addr %s1615, 8
        %s1617 = smul.addr %s1616, 8
        %s1618 = scalar_lea.vmem %s2, %s1617
      $region44: #{down_forward.2} parent=39 // pred_fallthru
        _
      // Predicated region
      $region45: #{down_forward.2} parent=39 // pred_check
        %p1619 = pneg %p112
      $region46: #{down_forward.2} parent=39 // pred_check_branch
        %1621 = sbr.rel (%p1619) target = $region48
      $region47: #{down_forward.2} parent=39 // pred_region
        %p1622 = scmp.lt.s32.totalorder %s16, 1
        %s1623 = scalar_select %p1622, %s16, 1
        %s1624 = smul.addr %s1623, 2
        %s1625 = scalar_lea.vmem %s3, %s1624
      $region48: #{down_forward.2} parent=39 // pred_fallthru
        _
    $region40: #{down_forward.2} parent=5 // pred_fallthru
      _
  $region6: #{down_forward.2} parent=0 // loop_footer
    %s14 = sadd.s32 1, %s10
  $region7: #{down_forward.2} parent=0 // loop_footer_branch
    %9 = sbr.rel target = $region3
  $region8: #{down_forward.2} parent=0 // loop_exit
    _

</llo_original>
